<compile_context>
chip_gen: v6e
topology: v6e:2x2x1
jax: 0.10.0
libtpu: 0.0.40
codegen_flags: <defaults>
</compile_context>

<pallas_src>
import functools

import jax
import jax.numpy as jnp
from jax.experimental import pallas as pl
from jax.experimental.pallas import tpu as pltpu

H = 200        # hidden size of the torch module (multiple of 8 -> no sublane padding)
K_AUG = 8      # features (2) + ones-row (1), zero-padded to a clean 8-sublane tile
LANE = 128


def _round_up(n, m):
    return (n + m - 1) // m * m


def _mlp_kernel(x_ref, w1_ref, w2_ref, b2_ref, o_ref):
    """Fused MLP tile, transposed layout (batch along lanes).

    x_ref  : (K_AUG, TB)  rows = [x0, x1, 1, 0, 0, 0, 0, 0] for TB batch elements
    w1_ref : (H, K_AUG)   cols = [w1_col0, w1_col1, b1, 0...]   (resident)
    w2_ref : (1, H)       fc2 weight row                         (resident)
    b2_ref : (1,)         fc2 bias, SMEM scalar
    o_ref  : (1, TB)      lane-dense output row for this batch tile
    """
    # Layer 1 + bias on the MXU: (H, 8) @ (8, TB) -> (H, TB).
    h = jnp.dot(
        w1_ref[...], x_ref[...],
        preferred_element_type=jnp.float32,
        precision=jax.lax.Precision.HIGHEST,
    )
    h = jnp.maximum(h, 0.0)  # ReLU: the only VPU work in the kernel.
    # Layer 2 on the MXU: (1, H) @ (H, TB) -> (1, TB); wide-N, lane-dense result.
    out = jnp.dot(
        w2_ref[...], h,
        preferred_element_type=jnp.float32,
        precision=jax.lax.Precision.HIGHEST,
    )
    o_ref[...] = (out + b2_ref[0]).astype(o_ref.dtype)


@functools.partial(jax.jit, static_argnames=("block_b",))
def stock_predictor_forward(x, w1, b1, w2, b2, *, block_b=4096):
    """Pallas forward. x: (B, 2) -> (B, 1) float32.

    Weights stored transposed vs torch's (out, in): w1 (2, 200), b1 (200,),
    w2 (200, 1), b2 (1,).
    """
    orig_dtype = x.dtype
    # Compute in f32 (bf16 would change min-tile legality and v5e has no bf16 VPU).
    x = x.astype(jnp.float32)
    w1 = w1.astype(jnp.float32)
    b1 = b1.astype(jnp.float32)
    w2 = w2.astype(jnp.float32)
    b2 = b2.astype(jnp.float32)

    B = x.shape[0]
    b128 = _round_up(B, LANE)
    bp = min(_round_up(block_b, LANE), b128)
    # v7x megacore: if everything fits in one tile but the batch spans >= 2 lane groups,
    # split into (at least) 2 grid steps so "parallel" can use both TensorCores.
    if bp >= b128 and b128 >= 2 * LANE:
        bp = _round_up(b128 // 2, LANE)
    b_pad = _round_up(B, bp)
    grid = (b_pad // bp,)

    # One-time layout plumbing (fused by XLA into a single relayout op):
    #   x_aug  (K_AUG, b_pad): rows [x0; x1; ones], zero-padded sublanes & batch lanes.
    #   w1_aug (H, K_AUG)    : cols [w1^T | b1 | zeros].
    ones_row = jnp.ones((1, B), jnp.float32)
    x_aug = jnp.concatenate([x.T, ones_row], axis=0)                     # (3, B)
    x_aug = jnp.pad(x_aug, ((0, K_AUG - 3), (0, b_pad - B)))             # (K_AUG, b_pad)
    w1_aug = jnp.concatenate([w1.T, b1.reshape(H, 1)], axis=1)           # (H, 3)
    w1_aug = jnp.pad(w1_aug, ((0, 0), (0, K_AUG - 3)))                   # (H, K_AUG)
    w2_row = w2.T                                                        # (1, H)
    b2_s = b2.reshape(1)                                                 # SMEM scalar

    # Per-step VMEM footprint: double-buffered x/out tiles + resident weights + the
    # (H, bp) h intermediate.  Capped at the 32 MiB scoped default (safe on v7x too).
    vmem_est = (2 * (K_AUG + 1) * bp * 4) + (H * bp * 4) + (H * (K_AUG + 1) * 4) + (1 << 16)
    vmem_limit = min(32 * 1024 * 1024, max(4 * 1024 * 1024, 2 * vmem_est))

    out = pl.pallas_call(
        _mlp_kernel,
        out_shape=jax.ShapeDtypeStruct((1, b_pad), jnp.float32),
        grid=grid,
        in_specs=[
            pl.BlockSpec((K_AUG, bp), lambda i: (0, i)),            # x tile (pipelined)
            pl.BlockSpec((H, K_AUG), lambda i: (0, 0)),             # w1_aug (resident)
            pl.BlockSpec((1, H), lambda i: (0, 0)),                 # w2 row (resident)
            pl.BlockSpec(memory_space=pltpu.MemorySpace.SMEM),      # b2 scalar
        ],
        out_specs=pl.BlockSpec((1, bp), lambda i: (0, i)),          # lane-dense out
        compiler_params=pltpu.CompilerParams(
            dimension_semantics=("parallel",),
            vmem_limit_bytes=int(vmem_limit),
        ),
    )(x_aug, w1_aug, w2_row, b2_s)

    # Padded batch lanes hold garbage (w2 . relu(b1) + b2); slice them off here and
    # never reuse / reduce over the padded region.
    return out[0, :B].reshape(B, 1).astype(orig_dtype)


def reference_forward(x, w1, b1, w2, b2):
    h = jnp.maximum(
        jnp.dot(x, w1, precision=jax.lax.Precision.HIGHEST) + b1, 0.0)
    return jnp.dot(h, w2, precision=jax.lax.Precision.HIGHEST) + b2


def stock_predictor(x, w1, b1, w2, b2, *, min_pallas_batch=512):
    """Recommended entry point: tiny batches are pure launch overhead for a Pallas
    kernel, so route them to plain XLA."""
    if x.shape[0] < min_pallas_batch:
        return reference_forward(x, w1, b1, w2, b2)
    return stock_predictor_forward(x, w1, b1, w2, b2)


def init_params(key):
    """Deterministic init mirroring torch.nn.Linear default (uniform +/- 1/sqrt(fan_in))."""
    k1, k2, k3, k4 = jax.random.split(key, 4)
    bound1 = 1.0 / jnp.sqrt(2.0)
    bound2 = 1.0 / jnp.sqrt(200.0)
    w1 = jax.random.uniform(k1, (2, 200), jnp.float32, -bound1, bound1)
    b1 = jax.random.uniform(k2, (200,), jnp.float32, -bound1, bound1)
    w2 = jax.random.uniform(k3, (200, 1), jnp.float32, -bound2, bound2)
    b2 = jax.random.uniform(k4, (1,), jnp.float32, -bound2, bound2)
    return w1, b1, w2, b2


if __name__ == "__main__":
    key = jax.random.PRNGKey(0)
    kp, kx1, kx2 = jax.random.split(key, 3)
    w1, b1, w2, b2 = init_params(kp)

    # Small-shape smoke test: single-tile grid, batch padded 8 -> 128.
    x_small = jax.random.normal(kx1, (8, 2), jnp.float32)
    out_small = jax.block_until_ready(
        stock_predictor_forward(x_small, w1, b1, w2, b2))
    ref_small = reference_forward(x_small, w1, b1, w2, b2)
    assert out_small.shape == (8, 1)
    assert jnp.allclose(out_small, ref_small, atol=2e-4, rtol=2e-4)

    # Multi-tile grid test: 3 batch tiles of 128, batch padded 300 -> 384.
    x_big = jax.random.normal(kx2, (300, 2), jnp.float32)
    out_big = jax.block_until_ready(
        stock_predictor_forward(x_big, w1, b1, w2, b2, block_b=128))
    ref_big = reference_forward(x_big, w1, b1, w2, b2)
    assert out_big.shape == (300, 1)
    assert jnp.allclose(out_big, ref_big, atol=2e-4, rtol=2e-4)

    # Default block size path: exercises the grid>=2 (v7x megacore) tile halving.
    out_def = jax.block_until_ready(
        stock_predictor_forward(x_big, w1, b1, w2, b2))
    assert out_def.shape == (300, 1)
    assert jnp.allclose(out_def, ref_big, atol=2e-4, rtol=2e-4)

    # Dispatcher fast path (small batch -> plain XLA).
    out_disp = jax.block_until_ready(stock_predictor(x_small, w1, b1, w2, b2))
    assert jnp.allclose(out_disp, ref_small, atol=2e-4, rtol=2e-4)

    print("KERNEL_OK")
</pallas_src>

<mosaic_0001>
module attributes {stable_mosaic.version = 11 : i64} {
  func.func @_mlp_kernel(%arg0: i32, %arg1: memref<8x128xf32, #tpu.memory_space<vmem>>, %arg2: memref<200x8xf32, #tpu.memory_space<vmem>>, %arg3: memref<1x200xf32, #tpu.memory_space<vmem>>, %arg4: memref<1xf32, #tpu.memory_space<smem>>, %arg5: memref<1x128xf32, #tpu.memory_space<vmem>>) attributes {dimension_semantics = [#tpu.dimension_semantics<parallel>], iteration_bounds = array<i64: 1>, scalar_prefetch = 0 : i64, scratch_operands = 0 : i64, tpu.core_type = #tpu.core_type<tc>, window_params = [{transform_indices = @transform_0, window_bounds = array<i64: 8, 128>}, {pipeline_mode = #tpu.pipeline_mode<synchronous>, transform_indices = @transform_1, window_bounds = array<i64: 200, 8>}, {pipeline_mode = #tpu.pipeline_mode<synchronous>, transform_indices = @transform_2, window_bounds = array<i64: 1, 200>}, {transform_indices = @transform_3, window_bounds = array<i64: 1>}, {transform_indices = @transform_4, window_bounds = array<i64: 1, 128>}]} {
    %c0 = arith.constant 0 : index
    %c0_0 = arith.constant 0 : index
    %0 = vector.load %arg2[%c0, %c0_0] : memref<200x8xf32, #tpu.memory_space<vmem>>, vector<200x8xf32>
    %c0_1 = arith.constant 0 : index
    %c0_2 = arith.constant 0 : index
    %1 = vector.load %arg1[%c0_1, %c0_2] : memref<8x128xf32, #tpu.memory_space<vmem>>, vector<8x128xf32>
    %cst = arith.constant dense<0.000000e+00> : vector<200x128xf32>
    %2 = tpu.matmul %0, %1, %cst {dimension_numbers = #tpu.dot_dimension_numbers<[1], [0], [0], [1], [0, 0, 1, 1], [], []>, precision = #tpu.contract_precision<fp32>} : vector<200x8xf32>, vector<8x128xf32>, vector<200x128xf32> -> vector<200x128xf32>
    %cst_3 = arith.constant 0.000000e+00 : f32
    %3 = vector.broadcast %cst_3 : f32 to vector<200x128xf32>
    %4 = arith.maximumf %2, %3 : vector<200x128xf32>
    %c0_4 = arith.constant 0 : index
    %c0_5 = arith.constant 0 : index
    %5 = vector.load %arg3[%c0_4, %c0_5] : memref<1x200xf32, #tpu.memory_space<vmem>>, vector<1x200xf32>
    %cst_6 = arith.constant dense<0.000000e+00> : vector<1x128xf32>
    %6 = tpu.matmul %5, %4, %cst_6 {dimension_numbers = #tpu.dot_dimension_numbers<[1], [0], [0], [1], [0, 0, 1, 1], [], []>, precision = #tpu.contract_precision<fp32>} : vector<1x200xf32>, vector<200x128xf32>, vector<1x128xf32> -> vector<1x128xf32>
    %c0_7 = arith.constant 0 : index
    %7 = memref.load %arg4[%c0_7] : memref<1xf32, #tpu.memory_space<smem>>
    %8 = vector.broadcast %7 : f32 to vector<1x128xf32>
    %9 = arith.addf %6, %8 : vector<1x128xf32>
    %c0_8 = arith.constant 0 : index
    %c0_9 = arith.constant 0 : index
    %10 = vector.load %arg5[%c0_8, %c0_9] : memref<1x128xf32, #tpu.memory_space<vmem>>, vector<1x128xf32>
    tpu.vector_store %arg5[%c0_8, %c0_9], %9 {strides = array<i32>} : memref<1x128xf32, #tpu.memory_space<vmem>>, vector<1x128xf32>,
    return
  }
  func.func @transform_0(%arg0: i32) -> (i32, i32) {
    %c0_i32 = arith.constant 0 : i32
    %c0_i32_0 = arith.constant 0 : i32
    return %c0_i32, %arg0 : i32, i32
  }
  func.func @transform_1(%arg0: i32) -> (i32, i32) {
    %c0_i32 = arith.constant 0 : i32
    %c0_i32_0 = arith.constant 0 : i32
    %c0_i32_1 = arith.constant 0 : i32
    return %c0_i32, %c0_i32_0 : i32, i32
  }
  func.func @transform_2(%arg0: i32) -> (i32, i32) {
    %c0_i32 = arith.constant 0 : i32
    %c0_i32_0 = arith.constant 0 : i32
    %c0_i32_1 = arith.constant 0 : i32
    return %c0_i32, %c0_i32_0 : i32, i32
  }
  func.func @transform_3(%arg0: i32) -> i32 {
    %c0_i32 = arith.constant 0 : i32
    %c0_i32_0 = arith.constant 0 : i32
    return %c0_i32 : i32
  }
  func.func @transform_4(%arg0: i32) -> (i32, i32) {
    %c0_i32 = arith.constant 0 : i32
    %c0_i32_0 = arith.constant 0 : i32
    return %c0_i32, %arg0 : i32, i32
  }
}

</mosaic_0001>

<llo_original>
// kernel: stock_predictor_forward.1
$region0: #{stock_predictor_forward.1}
  #allocation0 [shape = 'u32[]', space=smem, size = 0x4, offset = 0x4, fixed_abs, tag = 'smem constant byte address 0x4 - core index']
  #allocation1 [shape = 'u32[144,128]{1,0:T(1,128)}', space=vmem, size = 0x12000, scoped, tag = 'internal scratch']
  #allocation2 [shape = 'f32[1]{0:T(128)S(6)}', space=smem, size = 0x200, scoped, tag = 'scoped memory for stock_predictor_forward.1']
  %s0 = inlined_call_operand.vmem [shape: f32[8,128], index: 0, kind: input, shape index: {}]
  %s1 = inlined_call_operand.vmem [shape: f32[200,8], index: 1, kind: input, shape index: {}]
  %s2 = inlined_call_operand.vmem [shape: f32[1,200], index: 2, kind: input, shape index: {}]
  %s3 = inlined_call_operand.<no memory space> [shape: f32[1], index: 3, kind: input, shape index: {}]
  %s4 = inlined_call_operand.vmem [shape: f32[1,128], index: 4, kind: output, shape index: {}]
  %s5 = sld [smem:[#allocation0]]
  $region26: #{stock_predictor_forward.1} parent=0
    _
  %s7 = ssub.s32 1, %s5
  %s8 = scalar_select 0, %s7, %s5
  %9 = sst [smem:[#allocation2]] %s3
  // Predicated region
  $region2: #{stock_predictor_forward.1} parent=0 // pred_check
    _
  $region3: #{stock_predictor_forward.1} parent=0 // pred_check_branch
    %11 = sbr.rel (0) target = $region5
  $region4: #{stock_predictor_forward.1} parent=0 // pred_region
    _
  $region5: #{stock_predictor_forward.1} parent=0 // pred_fallthru
    _
  // Predicated region
  $region6: #{stock_predictor_forward.1} parent=0 // pred_check
    _
  $region7: #{stock_predictor_forward.1} parent=0 // pred_check_branch
    %13 = sbr.rel (0) target = $region9
  $region8: #{stock_predictor_forward.1} parent=0 // pred_region
    _
  $region9: #{stock_predictor_forward.1} parent=0 // pred_fallthru
    _
  // Predicated region
  $region10: #{stock_predictor_forward.1} parent=0 // pred_check
    _
  $region11: #{stock_predictor_forward.1} parent=0 // pred_check_branch
    %15 = sbr.rel (0) target = $region13
  $region12: #{stock_predictor_forward.1} parent=0 // pred_region
    _
  $region13: #{stock_predictor_forward.1} parent=0 // pred_fallthru
    _
  // Predicated region
  $region14: #{stock_predictor_forward.1} parent=0 // pred_check
    _
  $region15: #{stock_predictor_forward.1} parent=0 // pred_check_branch
    %17 = sbr.rel (0) target = $region17
  $region16: #{stock_predictor_forward.1} parent=0 // pred_region
    _
  $region17: #{stock_predictor_forward.1} parent=0 // pred_fallthru
    _
  %v18 = vld [vmem:[%s1] sm:$0xff]
  %v19 = vld [vmem:[%s1 + $0x8] sm:$0xff]
  %v20 = vld [vmem:[%s1 + $0x10] sm:$0xff]
  %v21 = vld [vmem:[%s1 + $0x18] sm:$0xff]
  %v22 = vld [vmem:[%s1 + $0x20] sm:$0xff]
  %v23 = vld [vmem:[%s1 + $0x28] sm:$0xff]
  %v24 = vld [vmem:[%s1 + $0x30] sm:$0xff]
  %v25 = vld [vmem:[%s1 + $0x38] sm:$0xff]
  %v26 = vld [vmem:[%s1 + $0x40] sm:$0xff]
  %v27 = vld [vmem:[%s1 + $0x48] sm:$0xff]
  %v28 = vld [vmem:[%s1 + $0x50] sm:$0xff]
  %v29 = vld [vmem:[%s1 + $0x58] sm:$0xff]
  %v30 = vld [vmem:[%s1 + $0x60] sm:$0xff]
  %v31 = vld [vmem:[%s1 + $0x68] sm:$0xff]
  %v32 = vld [vmem:[%s1 + $0x70] sm:$0xff]
  %v33 = vld [vmem:[%s1 + $0x78] sm:$0xff]
  %v34 = vld [vmem:[%s1 + $0x80] sm:$0xff]
  %v35 = vld [vmem:[%s1 + $0x88] sm:$0xff]
  %v36 = vld [vmem:[%s1 + $0x90] sm:$0xff]
  %v37 = vld [vmem:[%s1 + $0x98] sm:$0xff]
  %v38 = vld [vmem:[%s1 + $0xa0] sm:$0xff]
  %v39 = vld [vmem:[%s1 + $0xa8] sm:$0xff]
  %v40 = vld [vmem:[%s1 + $0xb0] sm:$0xff]
  %v41 = vld [vmem:[%s1 + $0xb8] sm:$0xff]
  %v42 = vld [vmem:[%s1 + $0xc0] sm:$0xff]
  %v43 = vld [vmem:[%s0] sm:$0xff]
  %vm44 = vcmask 64512
  %v46 = vsel %vm44, %v18, 0
  %v49 = vsel %vm44, %v19, 0
  %v52 = vsel %vm44, %v20, 0
  %v55 = vsel %vm44, %v21, 0
  %v58 = vsel %vm44, %v22, 0
  %v61 = vsel %vm44, %v23, 0
  %v64 = vsel %vm44, %v24, 0
  %v67 = vsel %vm44, %v25, 0
  %v70 = vsel %vm44, %v26, 0
  %v73 = vsel %vm44, %v27, 0
  %v76 = vsel %vm44, %v28, 0
  %v79 = vsel %vm44, %v29, 0
  %v82 = vsel %vm44, %v30, 0
  %v85 = vsel %vm44, %v31, 0
  %v88 = vsel %vm44, %v32, 0
  %v91 = vsel %vm44, %v33, 0
  %v94 = vsel %vm44, %v34, 0
  %v97 = vsel %vm44, %v35, 0
  %v100 = vsel %vm44, %v36, 0
  %v103 = vsel %vm44, %v37, 0
  %v106 = vsel %vm44, %v38, 0
  %v109 = vsel %vm44, %v39, 0
  %v112 = vsel %vm44, %v40, 0
  %v115 = vsel %vm44, %v41, 0
  %v118 = vsel %vm44, %v42, 0
  %120 = vmatprep.subr.mxu0 0.0
  %121 = vmatpush1.msra.mxu0 0.0
  %122 = vmatprep.subr.mxu0 0.0
  %123 = vmatpush1.msra.mxu0 0.0
  %124 = vmatprep.subr.mxu0 0.0
  %125 = vmatpush1.msra.mxu0 0.0
  %126 = vmatprep.subr.mxu0 0.0
  %127 = vmatpush1.msra.mxu0 0.0
  %128 = vmatprep.subr.mxu0 0.0
  %129 = vmatpush1.msra.mxu0 0.0
  %130 = vmatprep.subr.mxu0 0.0
  %131 = vmatpush1.msra.mxu0 0.0
  %132 = vmatprep.subr.mxu0 0.0
  %133 = vmatpush1.msra.mxu0 0.0
  %134 = vmatprep.subr.mxu0 0.0
  %135 = vmatpush1.msra.mxu0 0.0
  %136 = vmatprep.subr.mxu0 0.0
  %137 = vmatpush1.msra.mxu0 0.0
  %138 = vmatprep.subr.mxu0 0.0
  %139 = vmatpush1.msra.mxu0 0.0
  %140 = vmatprep.subr.mxu0 0.0
  %141 = vmatpush1.msra.mxu0 0.0
  %142 = vmatprep.subr.mxu0 0.0
  %143 = vmatpush1.msra.mxu0 0.0
  %144 = vmatprep.subr.mxu0 0.0
  %145 = vmatpush1.msra.mxu0 0.0
  %146 = vmatprep.subr.mxu0 0.0
  %147 = vmatpush1.msra.mxu0 0.0
  %148 = vmatprep.subr.mxu0 0.0
  %149 = vmatpush1.msra.mxu0 0.0
  %150 = vmatprep.subr.mxu0 0.0
  %v151 = vand.u32 %v43, 4294901760
  %152 = vmatpush1.msra.mxu0 %v151
  %153 = vmatprep.subr.mxu0 0.0
  %154 = vmatpush2.msra.mxu0 0.0
  %155 = vmatprep.subr.mxu0 0.0
  %156 = vmatpush2.msra.mxu0 0.0
  %157 = vmatprep.subr.mxu0 0.0
  %158 = vmatpush2.msra.mxu0 0.0
  %159 = vmatprep.subr.mxu0 0.0
  %160 = vmatpush2.msra.mxu0 0.0
  %161 = vmatprep.subr.mxu0 0.0
  %162 = vmatpush2.msra.mxu0 0.0
  %163 = vmatprep.subr.mxu0 0.0
  %164 = vmatpush2.msra.mxu0 0.0
  %165 = vmatprep.subr.mxu0 0.0
  %166 = vmatpush2.msra.mxu0 0.0
  %167 = vmatprep.subr.mxu0 0.0
  %168 = vmatpush2.msra.mxu0 0.0
  %169 = vmatprep.subr.mxu0 0.0
  %170 = vmatpush2.msra.mxu0 0.0
  %171 = vmatprep.subr.mxu0 0.0
  %172 = vmatpush2.msra.mxu0 0.0
  %173 = vmatprep.subr.mxu0 0.0
  %174 = vmatpush2.msra.mxu0 0.0
  %175 = vmatprep.subr.mxu0 0.0
  %176 = vmatpush2.msra.mxu0 0.0
  %177 = vmatprep.subr.mxu0 0.0
  %178 = vmatpush2.msra.mxu0 0.0
  %179 = vmatprep.subr.mxu0 0.0
  %180 = vmatpush2.msra.mxu0 0.0
  %181 = vmatprep.subr.mxu0 0.0
  %182 = vmatpush2.msra.mxu0 0.0
  %183 = vmatprep.subr.mxu0 0.0
  %184 = vmatpush2.msra.mxu0 0.0
  %185 = vmatprep.mubr.f32.mxu0 0.0
  %v186 = vand.u32 %v46, 4294901760
  %v187 = vsub.f32 %v46, %v186
  %v188 = vand.u32 %v187, 4294901760
  %v189 = vsub.f32 %v187, %v188
  %v190 = vand.u32 %v189, 4294901760
  %191 = vmatmul.mubr.f32.gmra.mxu0 %v190
  %v192 = vpop.f32.mrf.mxu0
  %v193 = vadd.f32 0.0, %v192
  %v194 = vpop.f32.mrf.mxu0
  %195 = vmatprep.mubr.f32.mxu0 0.0
  %v196 = vand.u32 %v49, 4294901760
  %v197 = vsub.f32 %v49, %v196
  %v198 = vand.u32 %v197, 4294901760
  %v199 = vsub.f32 %v197, %v198
  %v200 = vand.u32 %v199, 4294901760
  %201 = vmatmul.mubr.f32.gmra.mxu0 %v200
  %v202 = vpop.f32.mrf.mxu0
  %v203 = vadd.f32 0.0, %v202
  %v204 = vpop.f32.mrf.mxu0
  %205 = vmatprep.mubr.f32.mxu0 0.0
  %v206 = vand.u32 %v52, 4294901760
  %v207 = vsub.f32 %v52, %v206
  %v208 = vand.u32 %v207, 4294901760
  %v209 = vsub.f32 %v207, %v208
  %v210 = vand.u32 %v209, 4294901760
  %211 = vmatmul.mubr.f32.gmra.mxu0 %v210
  %v212 = vpop.f32.mrf.mxu0
  %v213 = vadd.f32 0.0, %v212
  %v214 = vpop.f32.mrf.mxu0
  %215 = vmatprep.mubr.f32.mxu0 0.0
  %v216 = vand.u32 %v55, 4294901760
  %v217 = vsub.f32 %v55, %v216
  %v218 = vand.u32 %v217, 4294901760
  %v219 = vsub.f32 %v217, %v218
  %v220 = vand.u32 %v219, 4294901760
  %221 = vmatmul.mubr.f32.gmra.mxu0 %v220
  %v222 = vpop.f32.mrf.mxu0
  %v223 = vadd.f32 0.0, %v222
  %v224 = vpop.f32.mrf.mxu0
  %225 = vmatprep.mubr.f32.mxu0 0.0
  %v226 = vand.u32 %v58, 4294901760
  %v227 = vsub.f32 %v58, %v226
  %v228 = vand.u32 %v227, 4294901760
  %v229 = vsub.f32 %v227, %v228
  %v230 = vand.u32 %v229, 4294901760
  %231 = vmatmul.mubr.f32.gmra.mxu0 %v230
  %v232 = vpop.f32.mrf.mxu0
  %v233 = vadd.f32 0.0, %v232
  %v234 = vpop.f32.mrf.mxu0
  %235 = vmatprep.mubr.f32.mxu0 0.0
  %v236 = vand.u32 %v61, 4294901760
  %v237 = vsub.f32 %v61, %v236
  %v238 = vand.u32 %v237, 4294901760
  %v239 = vsub.f32 %v237, %v238
  %v240 = vand.u32 %v239, 4294901760
  %241 = vmatmul.mubr.f32.gmra.mxu0 %v240
  %v242 = vpop.f32.mrf.mxu0
  %v243 = vadd.f32 0.0, %v242
  %v244 = vpop.f32.mrf.mxu0
  %245 = vmatprep.mubr.f32.mxu0 0.0
  %v246 = vand.u32 %v64, 4294901760
  %v247 = vsub.f32 %v64, %v246
  %v248 = vand.u32 %v247, 4294901760
  %v249 = vsub.f32 %v247, %v248
  %v250 = vand.u32 %v249, 4294901760
  %251 = vmatmul.mubr.f32.gmra.mxu0 %v250
  %v252 = vpop.f32.mrf.mxu0
  %v253 = vadd.f32 0.0, %v252
  %v254 = vpop.f32.mrf.mxu0
  %255 = vmatprep.mubr.f32.mxu0 0.0
  %v256 = vand.u32 %v67, 4294901760
  %v257 = vsub.f32 %v67, %v256
  %v258 = vand.u32 %v257, 4294901760
  %v259 = vsub.f32 %v257, %v258
  %v260 = vand.u32 %v259, 4294901760
  %261 = vmatmul.mubr.f32.gmra.mxu0 %v260
  %v262 = vpop.f32.mrf.mxu0
  %v263 = vadd.f32 0.0, %v262
  %v264 = vpop.f32.mrf.mxu0
  %265 = vmatprep.mubr.f32.mxu0 0.0
  %v266 = vand.u32 %v70, 4294901760
  %v267 = vsub.f32 %v70, %v266
  %v268 = vand.u32 %v267, 4294901760
  %v269 = vsub.f32 %v267, %v268
  %v270 = vand.u32 %v269, 4294901760
  %271 = vmatmul.mubr.f32.gmra.mxu0 %v270
  %v272 = vpop.f32.mrf.mxu0
  %v273 = vadd.f32 0.0, %v272
  %v274 = vpop.f32.mrf.mxu0
  %275 = vmatprep.mubr.f32.mxu0 0.0
  %v276 = vand.u32 %v73, 4294901760
  %v277 = vsub.f32 %v73, %v276
  %v278 = vand.u32 %v277, 4294901760
  %v279 = vsub.f32 %v277, %v278
  %v280 = vand.u32 %v279, 4294901760
  %281 = vmatmul.mubr.f32.gmra.mxu0 %v280
  %v282 = vpop.f32.mrf.mxu0
  %v283 = vadd.f32 0.0, %v282
  %v284 = vpop.f32.mrf.mxu0
  %285 = vmatprep.mubr.f32.mxu0 0.0
  %v286 = vand.u32 %v76, 4294901760
  %v287 = vsub.f32 %v76, %v286
  %v288 = vand.u32 %v287, 4294901760
  %v289 = vsub.f32 %v287, %v288
  %v290 = vand.u32 %v289, 4294901760
  %291 = vmatmul.mubr.f32.gmra.mxu0 %v290
  %v292 = vpop.f32.mrf.mxu0
  %v293 = vadd.f32 0.0, %v292
  %v294 = vpop.f32.mrf.mxu0
  %295 = vmatprep.mubr.f32.mxu0 0.0
  %v296 = vand.u32 %v79, 4294901760
  %v297 = vsub.f32 %v79, %v296
  %v298 = vand.u32 %v297, 4294901760
  %v299 = vsub.f32 %v297, %v298
  %v300 = vand.u32 %v299, 4294901760
  %301 = vmatmul.mubr.f32.gmra.mxu0 %v300
  %v302 = vpop.f32.mrf.mxu0
  %v303 = vadd.f32 0.0, %v302
  %v304 = vpop.f32.mrf.mxu0
  %305 = vmatprep.mubr.f32.mxu0 0.0
  %v306 = vand.u32 %v82, 4294901760
  %v307 = vsub.f32 %v82, %v306
  %v308 = vand.u32 %v307, 4294901760
  %v309 = vsub.f32 %v307, %v308
  %v310 = vand.u32 %v309, 4294901760
  %311 = vmatmul.mubr.f32.gmra.mxu0 %v310
  %v312 = vpop.f32.mrf.mxu0
  %v313 = vadd.f32 0.0, %v312
  %v314 = vpop.f32.mrf.mxu0
  %315 = vmatprep.mubr.f32.mxu0 0.0
  %v316 = vand.u32 %v85, 4294901760
  %v317 = vsub.f32 %v85, %v316
  %v318 = vand.u32 %v317, 4294901760
  %v319 = vsub.f32 %v317, %v318
  %v320 = vand.u32 %v319, 4294901760
  %321 = vmatmul.mubr.f32.gmra.mxu0 %v320
  %v322 = vpop.f32.mrf.mxu0
  %v323 = vadd.f32 0.0, %v322
  %v324 = vpop.f32.mrf.mxu0
  %325 = vmatprep.mubr.f32.mxu0 0.0
  %v326 = vand.u32 %v88, 4294901760
  %v327 = vsub.f32 %v88, %v326
  %v328 = vand.u32 %v327, 4294901760
  %v329 = vsub.f32 %v327, %v328
  %v330 = vand.u32 %v329, 4294901760
  %331 = vmatmul.mubr.f32.gmra.mxu0 %v330
  %v332 = vpop.f32.mrf.mxu0
  %v333 = vadd.f32 0.0, %v332
  %v334 = vpop.f32.mrf.mxu0
  %335 = vmatprep.mubr.f32.mxu0 0.0
  %v336 = vand.u32 %v91, 4294901760
  %v337 = vsub.f32 %v91, %v336
  %v338 = vand.u32 %v337, 4294901760
  %v339 = vsub.f32 %v337, %v338
  %v340 = vand.u32 %v339, 4294901760
  %341 = vmatmul.mubr.f32.gmra.mxu0 %v340
  %v342 = vpop.f32.mrf.mxu0
  %v343 = vadd.f32 0.0, %v342
  %v344 = vpop.f32.mrf.mxu0
  %345 = vmatprep.mubr.f32.mxu0 0.0
  %v346 = vand.u32 %v94, 4294901760
  %v347 = vsub.f32 %v94, %v346
  %v348 = vand.u32 %v347, 4294901760
  %v349 = vsub.f32 %v347, %v348
  %v350 = vand.u32 %v349, 4294901760
  %351 = vmatmul.mubr.f32.gmra.mxu0 %v350
  %v352 = vpop.f32.mrf.mxu0
  %v353 = vadd.f32 0.0, %v352
  %v354 = vpop.f32.mrf.mxu0
  %355 = vmatprep.mubr.f32.mxu0 0.0
  %v356 = vand.u32 %v97, 4294901760
  %v357 = vsub.f32 %v97, %v356
  %v358 = vand.u32 %v357, 4294901760
  %v359 = vsub.f32 %v357, %v358
  %v360 = vand.u32 %v359, 4294901760
  %361 = vmatmul.mubr.f32.gmra.mxu0 %v360
  %v362 = vpop.f32.mrf.mxu0
  %v363 = vadd.f32 0.0, %v362
  %v364 = vpop.f32.mrf.mxu0
  %365 = vmatprep.mubr.f32.mxu0 0.0
  %v366 = vand.u32 %v100, 4294901760
  %v367 = vsub.f32 %v100, %v366
  %v368 = vand.u32 %v367, 4294901760
  %v369 = vsub.f32 %v367, %v368
  %v370 = vand.u32 %v369, 4294901760
  %371 = vmatmul.mubr.f32.gmra.mxu0 %v370
  %v372 = vpop.f32.mrf.mxu0
  %v373 = vadd.f32 0.0, %v372
  %v374 = vpop.f32.mrf.mxu0
  %375 = vmatprep.mubr.f32.mxu0 0.0
  %v376 = vand.u32 %v103, 4294901760
  %v377 = vsub.f32 %v103, %v376
  %v378 = vand.u32 %v377, 4294901760
  %v379 = vsub.f32 %v377, %v378
  %v380 = vand.u32 %v379, 4294901760
  %381 = vmatmul.mubr.f32.gmra.mxu0 %v380
  %v382 = vpop.f32.mrf.mxu0
  %v383 = vadd.f32 0.0, %v382
  %v384 = vpop.f32.mrf.mxu0
  %385 = vmatprep.mubr.f32.mxu0 0.0
  %v386 = vand.u32 %v106, 4294901760
  %v387 = vsub.f32 %v106, %v386
  %v388 = vand.u32 %v387, 4294901760
  %v389 = vsub.f32 %v387, %v388
  %v390 = vand.u32 %v389, 4294901760
  %391 = vmatmul.mubr.f32.gmra.mxu0 %v390
  %v392 = vpop.f32.mrf.mxu0
  %v393 = vadd.f32 0.0, %v392
  %v394 = vpop.f32.mrf.mxu0
  %395 = vmatprep.mubr.f32.mxu0 0.0
  %v396 = vand.u32 %v109, 4294901760
  %v397 = vsub.f32 %v109, %v396
  %v398 = vand.u32 %v397, 4294901760
  %v399 = vsub.f32 %v397, %v398
  %v400 = vand.u32 %v399, 4294901760
  %401 = vmatmul.mubr.f32.gmra.mxu0 %v400
  %v402 = vpop.f32.mrf.mxu0
  %v403 = vadd.f32 0.0, %v402
  %v404 = vpop.f32.mrf.mxu0
  %405 = vmatprep.mubr.f32.mxu0 0.0
  %v406 = vand.u32 %v112, 4294901760
  %v407 = vsub.f32 %v112, %v406
  %v408 = vand.u32 %v407, 4294901760
  %v409 = vsub.f32 %v407, %v408
  %v410 = vand.u32 %v409, 4294901760
  %411 = vmatmul.mubr.f32.gmra.mxu0 %v410
  %v412 = vpop.f32.mrf.mxu0
  %v413 = vadd.f32 0.0, %v412
  %v414 = vpop.f32.mrf.mxu0
  %415 = vmatprep.mubr.f32.mxu0 0.0
  %v416 = vand.u32 %v115, 4294901760
  %v417 = vsub.f32 %v115, %v416
  %v418 = vand.u32 %v417, 4294901760
  %v419 = vsub.f32 %v417, %v418
  %v420 = vand.u32 %v419, 4294901760
  %421 = vmatmul.mubr.f32.gmra.mxu0 %v420
  %v422 = vpop.f32.mrf.mxu0
  %v423 = vadd.f32 0.0, %v422
  %v424 = vpop.f32.mrf.mxu0
  %425 = vmatprep.mubr.f32.mxu0 0.0
  %v426 = vand.u32 %v118, 4294901760
  %v427 = vsub.f32 %v118, %v426
  %v428 = vand.u32 %v427, 4294901760
  %v429 = vsub.f32 %v427, %v428
  %v430 = vand.u32 %v429, 4294901760
  %431 = vmatmul.mubr.f32.gmra.mxu0 %v430
  %v432 = vpop.f32.mrf.mxu0
  %v433 = vadd.f32 0.0, %v432
  %v434 = vpop.f32.mrf.mxu0
  %435 = vdwg.mxu0
  %436 = vmatprep.subr.mxu0 0.0
  %437 = vmatpush1.msra.mxu0 0.0
  %438 = vmatprep.subr.mxu0 0.0
  %439 = vmatpush1.msra.mxu0 0.0
  %440 = vmatprep.subr.mxu0 0.0
  %441 = vmatpush1.msra.mxu0 0.0
  %442 = vmatprep.subr.mxu0 0.0
  %443 = vmatpush1.msra.mxu0 0.0
  %444 = vmatprep.subr.mxu0 0.0
  %445 = vmatpush1.msra.mxu0 0.0
  %446 = vmatprep.subr.mxu0 0.0
  %447 = vmatpush1.msra.mxu0 0.0
  %448 = vmatprep.subr.mxu0 0.0
  %449 = vmatpush1.msra.mxu0 0.0
  %450 = vmatprep.subr.mxu0 0.0
  %451 = vmatpush1.msra.mxu0 0.0
  %452 = vmatprep.subr.mxu0 0.0
  %453 = vmatpush1.msra.mxu0 0.0
  %454 = vmatprep.subr.mxu0 0.0
  %455 = vmatpush1.msra.mxu0 0.0
  %456 = vmatprep.subr.mxu0 0.0
  %457 = vmatpush1.msra.mxu0 0.0
  %458 = vmatprep.subr.mxu0 0.0
  %459 = vmatpush1.msra.mxu0 0.0
  %460 = vmatprep.subr.mxu0 0.0
  %461 = vmatpush1.msra.mxu0 0.0
  %462 = vmatprep.subr.mxu0 0.0
  %463 = vmatpush1.msra.mxu0 0.0
  %464 = vmatprep.subr.mxu0 0.0
  %465 = vmatpush1.msra.mxu0 0.0
  %466 = vmatprep.subr.mxu0 0.0
  %v467 = vand.u32 %v43, 4294901760
  %v468 = vsub.f32 %v43, %v467
  %v469 = vand.u32 %v468, 4294901760
  %v470 = vsub.f32 %v468, %v469
  %v471 = vand.u32 %v470, 4294901760
  %472 = vmatpush1.msra.mxu0 %v471
  %473 = vmatprep.subr.mxu0 0.0
  %474 = vmatpush2.msra.mxu0 0.0
  %475 = vmatprep.subr.mxu0 0.0
  %476 = vmatpush2.msra.mxu0 0.0
  %477 = vmatprep.subr.mxu0 0.0
  %478 = vmatpush2.msra.mxu0 0.0
  %479 = vmatprep.subr.mxu0 0.0
  %480 = vmatpush2.msra.mxu0 0.0
  %481 = vmatprep.subr.mxu0 0.0
  %482 = vmatpush2.msra.mxu0 0.0
  %483 = vmatprep.subr.mxu0 0.0
  %484 = vmatpush2.msra.mxu0 0.0
  %485 = vmatprep.subr.mxu0 0.0
  %486 = vmatpush2.msra.mxu0 0.0
  %487 = vmatprep.subr.mxu0 0.0
  %488 = vmatpush2.msra.mxu0 0.0
  %489 = vmatprep.subr.mxu0 0.0
  %490 = vmatpush2.msra.mxu0 0.0
  %491 = vmatprep.subr.mxu0 0.0
  %492 = vmatpush2.msra.mxu0 0.0
  %493 = vmatprep.subr.mxu0 0.0
  %494 = vmatpush2.msra.mxu0 0.0
  %495 = vmatprep.subr.mxu0 0.0
  %496 = vmatpush2.msra.mxu0 0.0
  %497 = vmatprep.subr.mxu0 0.0
  %498 = vmatpush2.msra.mxu0 0.0
  %499 = vmatprep.subr.mxu0 0.0
  %500 = vmatpush2.msra.mxu0 0.0
  %501 = vmatprep.subr.mxu0 0.0
  %502 = vmatpush2.msra.mxu0 0.0
  %503 = vmatprep.subr.mxu0 0.0
  %504 = vmatpush2.msra.mxu0 0.0
  %505 = vmatprep.mubr.f32.mxu0 0.0
  %v506 = vand.u32 %v46, 4294901760
  %507 = vmatmul.mubr.f32.gmra.mxu0 %v506
  %v508 = vpop.f32.mrf.mxu0
  %v509 = vadd.f32 %v193, %v508
  %v510 = vpop.f32.mrf.mxu0
  %511 = vmatprep.mubr.f32.mxu0 0.0
  %v512 = vand.u32 %v49, 4294901760
  %513 = vmatmul.mubr.f32.gmra.mxu0 %v512
  %v514 = vpop.f32.mrf.mxu0
  %v515 = vadd.f32 %v203, %v514
  %v516 = vpop.f32.mrf.mxu0
  %517 = vmatprep.mubr.f32.mxu0 0.0
  %v518 = vand.u32 %v52, 4294901760
  %519 = vmatmul.mubr.f32.gmra.mxu0 %v518
  %v520 = vpop.f32.mrf.mxu0
  %v521 = vadd.f32 %v213, %v520
  %v522 = vpop.f32.mrf.mxu0
  %523 = vmatprep.mubr.f32.mxu0 0.0
  %v524 = vand.u32 %v55, 4294901760
  %525 = vmatmul.mubr.f32.gmra.mxu0 %v524
  %v526 = vpop.f32.mrf.mxu0
  %v527 = vadd.f32 %v223, %v526
  %v528 = vpop.f32.mrf.mxu0
  %529 = vmatprep.mubr.f32.mxu0 0.0
  %v530 = vand.u32 %v58, 4294901760
  %531 = vmatmul.mubr.f32.gmra.mxu0 %v530
  %v532 = vpop.f32.mrf.mxu0
  %v533 = vadd.f32 %v233, %v532
  %v534 = vpop.f32.mrf.mxu0
  %535 = vmatprep.mubr.f32.mxu0 0.0
  %v536 = vand.u32 %v61, 4294901760
  %537 = vmatmul.mubr.f32.gmra.mxu0 %v536
  %v538 = vpop.f32.mrf.mxu0
  %v539 = vadd.f32 %v243, %v538
  %v540 = vpop.f32.mrf.mxu0
  %541 = vmatprep.mubr.f32.mxu0 0.0
  %v542 = vand.u32 %v64, 4294901760
  %543 = vmatmul.mubr.f32.gmra.mxu0 %v542
  %v544 = vpop.f32.mrf.mxu0
  %v545 = vadd.f32 %v253, %v544
  %v546 = vpop.f32.mrf.mxu0
  %547 = vmatprep.mubr.f32.mxu0 0.0
  %v548 = vand.u32 %v67, 4294901760
  %549 = vmatmul.mubr.f32.gmra.mxu0 %v548
  %v550 = vpop.f32.mrf.mxu0
  %v551 = vadd.f32 %v263, %v550
  %v552 = vpop.f32.mrf.mxu0
  %553 = vmatprep.mubr.f32.mxu0 0.0
  %v554 = vand.u32 %v70, 4294901760
  %555 = vmatmul.mubr.f32.gmra.mxu0 %v554
  %v556 = vpop.f32.mrf.mxu0
  %v557 = vadd.f32 %v273, %v556
  %v558 = vpop.f32.mrf.mxu0
  %559 = vmatprep.mubr.f32.mxu0 0.0
  %v560 = vand.u32 %v73, 4294901760
  %561 = vmatmul.mubr.f32.gmra.mxu0 %v560
  %v562 = vpop.f32.mrf.mxu0
  %v563 = vadd.f32 %v283, %v562
  %v564 = vpop.f32.mrf.mxu0
  %565 = vmatprep.mubr.f32.mxu0 0.0
  %v566 = vand.u32 %v76, 4294901760
  %567 = vmatmul.mubr.f32.gmra.mxu0 %v566
  %v568 = vpop.f32.mrf.mxu0
  %v569 = vadd.f32 %v293, %v568
  %v570 = vpop.f32.mrf.mxu0
  %571 = vmatprep.mubr.f32.mxu0 0.0
  %v572 = vand.u32 %v79, 4294901760
  %573 = vmatmul.mubr.f32.gmra.mxu0 %v572
  %v574 = vpop.f32.mrf.mxu0
  %v575 = vadd.f32 %v303, %v574
  %v576 = vpop.f32.mrf.mxu0
  %577 = vmatprep.mubr.f32.mxu0 0.0
  %v578 = vand.u32 %v82, 4294901760
  %579 = vmatmul.mubr.f32.gmra.mxu0 %v578
  %v580 = vpop.f32.mrf.mxu0
  %v581 = vadd.f32 %v313, %v580
  %v582 = vpop.f32.mrf.mxu0
  %583 = vmatprep.mubr.f32.mxu0 0.0
  %v584 = vand.u32 %v85, 4294901760
  %585 = vmatmul.mubr.f32.gmra.mxu0 %v584
  %v586 = vpop.f32.mrf.mxu0
  %v587 = vadd.f32 %v323, %v586
  %v588 = vpop.f32.mrf.mxu0
  %589 = vmatprep.mubr.f32.mxu0 0.0
  %v590 = vand.u32 %v88, 4294901760
  %591 = vmatmul.mubr.f32.gmra.mxu0 %v590
  %v592 = vpop.f32.mrf.mxu0
  %v593 = vadd.f32 %v333, %v592
  %v594 = vpop.f32.mrf.mxu0
  %595 = vmatprep.mubr.f32.mxu0 0.0
  %v596 = vand.u32 %v91, 4294901760
  %597 = vmatmul.mubr.f32.gmra.mxu0 %v596
  %v598 = vpop.f32.mrf.mxu0
  %v599 = vadd.f32 %v343, %v598
  %v600 = vpop.f32.mrf.mxu0
  %601 = vmatprep.mubr.f32.mxu0 0.0
  %v602 = vand.u32 %v94, 4294901760
  %603 = vmatmul.mubr.f32.gmra.mxu0 %v602
  %v604 = vpop.f32.mrf.mxu0
  %v605 = vadd.f32 %v353, %v604
  %v606 = vpop.f32.mrf.mxu0
  %607 = vmatprep.mubr.f32.mxu0 0.0
  %v608 = vand.u32 %v97, 4294901760
  %609 = vmatmul.mubr.f32.gmra.mxu0 %v608
  %v610 = vpop.f32.mrf.mxu0
  %v611 = vadd.f32 %v363, %v610
  %v612 = vpop.f32.mrf.mxu0
  %613 = vmatprep.mubr.f32.mxu0 0.0
  %v614 = vand.u32 %v100, 4294901760
  %615 = vmatmul.mubr.f32.gmra.mxu0 %v614
  %v616 = vpop.f32.mrf.mxu0
  %v617 = vadd.f32 %v373, %v616
  %v618 = vpop.f32.mrf.mxu0
  %619 = vmatprep.mubr.f32.mxu0 0.0
  %v620 = vand.u32 %v103, 4294901760
  %621 = vmatmul.mubr.f32.gmra.mxu0 %v620
  %v622 = vpop.f32.mrf.mxu0
  %v623 = vadd.f32 %v383, %v622
  %v624 = vpop.f32.mrf.mxu0
  %625 = vmatprep.mubr.f32.mxu0 0.0
  %v626 = vand.u32 %v106, 4294901760
  %627 = vmatmul.mubr.f32.gmra.mxu0 %v626
  %v628 = vpop.f32.mrf.mxu0
  %v629 = vadd.f32 %v393, %v628
  %v630 = vpop.f32.mrf.mxu0
  %631 = vmatprep.mubr.f32.mxu0 0.0
  %v632 = vand.u32 %v109, 4294901760
  %633 = vmatmul.mubr.f32.gmra.mxu0 %v632
  %v634 = vpop.f32.mrf.mxu0
  %v635 = vadd.f32 %v403, %v634
  %v636 = vpop.f32.mrf.mxu0
  %637 = vmatprep.mubr.f32.mxu0 0.0
  %v638 = vand.u32 %v112, 4294901760
  %639 = vmatmul.mubr.f32.gmra.mxu0 %v638
  %v640 = vpop.f32.mrf.mxu0
  %v641 = vadd.f32 %v413, %v640
  %v642 = vpop.f32.mrf.mxu0
  %643 = vmatprep.mubr.f32.mxu0 0.0
  %v644 = vand.u32 %v115, 4294901760
  %645 = vmatmul.mubr.f32.gmra.mxu0 %v644
  %v646 = vpop.f32.mrf.mxu0
  %v647 = vadd.f32 %v423, %v646
  %v648 = vpop.f32.mrf.mxu0
  %649 = vmatprep.mubr.f32.mxu0 0.0
  %v650 = vand.u32 %v118, 4294901760
  %651 = vmatmul.mubr.f32.gmra.mxu0 %v650
  %v652 = vpop.f32.mrf.mxu0
  %v653 = vadd.f32 %v433, %v652
  %v654 = vpop.f32.mrf.mxu0
  %655 = vdwg.mxu0
  %656 = vmatprep.subr.mxu0 0.0
  %657 = vmatpush1.msra.mxu0 0.0
  %658 = vmatprep.subr.mxu0 0.0
  %659 = vmatpush1.msra.mxu0 0.0
  %660 = vmatprep.subr.mxu0 0.0
  %661 = vmatpush1.msra.mxu0 0.0
  %662 = vmatprep.subr.mxu0 0.0
  %663 = vmatpush1.msra.mxu0 0.0
  %664 = vmatprep.subr.mxu0 0.0
  %665 = vmatpush1.msra.mxu0 0.0
  %666 = vmatprep.subr.mxu0 0.0
  %667 = vmatpush1.msra.mxu0 0.0
  %668 = vmatprep.subr.mxu0 0.0
  %669 = vmatpush1.msra.mxu0 0.0
  %670 = vmatprep.subr.mxu0 0.0
  %671 = vmatpush1.msra.mxu0 0.0
  %672 = vmatprep.subr.mxu0 0.0
  %673 = vmatpush1.msra.mxu0 0.0
  %674 = vmatprep.subr.mxu0 0.0
  %675 = vmatpush1.msra.mxu0 0.0
  %676 = vmatprep.subr.mxu0 0.0
  %677 = vmatpush1.msra.mxu0 0.0
  %678 = vmatprep.subr.mxu0 0.0
  %679 = vmatpush1.msra.mxu0 0.0
  %680 = vmatprep.subr.mxu0 0.0
  %681 = vmatpush1.msra.mxu0 0.0
  %682 = vmatprep.subr.mxu0 0.0
  %683 = vmatpush1.msra.mxu0 0.0
  %684 = vmatprep.subr.mxu0 0.0
  %685 = vmatpush1.msra.mxu0 0.0
  %686 = vmatprep.subr.mxu0 0.0
  %v687 = vand.u32 %v43, 4294901760
  %v688 = vsub.f32 %v43, %v687
  %689 = vmatpush1.msra.mxu0 %v688
  %690 = vmatprep.subr.mxu0 0.0
  %691 = vmatpush2.msra.mxu0 0.0
  %692 = vmatprep.subr.mxu0 0.0
  %693 = vmatpush2.msra.mxu0 0.0
  %694 = vmatprep.subr.mxu0 0.0
  %695 = vmatpush2.msra.mxu0 0.0
  %696 = vmatprep.subr.mxu0 0.0
  %697 = vmatpush2.msra.mxu0 0.0
  %698 = vmatprep.subr.mxu0 0.0
  %699 = vmatpush2.msra.mxu0 0.0
  %700 = vmatprep.subr.mxu0 0.0
  %701 = vmatpush2.msra.mxu0 0.0
  %702 = vmatprep.subr.mxu0 0.0
  %703 = vmatpush2.msra.mxu0 0.0
  %704 = vmatprep.subr.mxu0 0.0
  %705 = vmatpush2.msra.mxu0 0.0
  %706 = vmatprep.subr.mxu0 0.0
  %707 = vmatpush2.msra.mxu0 0.0
  %708 = vmatprep.subr.mxu0 0.0
  %709 = vmatpush2.msra.mxu0 0.0
  %710 = vmatprep.subr.mxu0 0.0
  %711 = vmatpush2.msra.mxu0 0.0
  %712 = vmatprep.subr.mxu0 0.0
  %713 = vmatpush2.msra.mxu0 0.0
  %714 = vmatprep.subr.mxu0 0.0
  %715 = vmatpush2.msra.mxu0 0.0
  %716 = vmatprep.subr.mxu0 0.0
  %717 = vmatpush2.msra.mxu0 0.0
  %718 = vmatprep.subr.mxu0 0.0
  %719 = vmatpush2.msra.mxu0 0.0
  %720 = vmatprep.subr.mxu0 0.0
  %721 = vmatpush2.msra.mxu0 0.0
  %722 = vmatprep.mubr.f32.mxu0 0.0
  %v723 = vand.u32 %v46, 4294901760
  %v724 = vsub.f32 %v46, %v723
  %725 = vmatmul.mubr.f32.gmra.mxu0 %v724
  %v726 = vpop.f32.mrf.mxu0
  %v727 = vadd.f32 %v509, %v726
  %v728 = vpop.f32.mrf.mxu0
  %729 = vmatprep.mubr.f32.mxu0 0.0
  %v730 = vand.u32 %v49, 4294901760
  %v731 = vsub.f32 %v49, %v730
  %732 = vmatmul.mubr.f32.gmra.mxu0 %v731
  %v733 = vpop.f32.mrf.mxu0
  %v734 = vadd.f32 %v515, %v733
  %v735 = vpop.f32.mrf.mxu0
  %736 = vmatprep.mubr.f32.mxu0 0.0
  %v737 = vand.u32 %v52, 4294901760
  %v738 = vsub.f32 %v52, %v737
  %739 = vmatmul.mubr.f32.gmra.mxu0 %v738
  %v740 = vpop.f32.mrf.mxu0
  %v741 = vadd.f32 %v521, %v740
  %v742 = vpop.f32.mrf.mxu0
  %743 = vmatprep.mubr.f32.mxu0 0.0
  %v744 = vand.u32 %v55, 4294901760
  %v745 = vsub.f32 %v55, %v744
  %746 = vmatmul.mubr.f32.gmra.mxu0 %v745
  %v747 = vpop.f32.mrf.mxu0
  %v748 = vadd.f32 %v527, %v747
  %v749 = vpop.f32.mrf.mxu0
  %750 = vmatprep.mubr.f32.mxu0 0.0
  %v751 = vand.u32 %v58, 4294901760
  %v752 = vsub.f32 %v58, %v751
  %753 = vmatmul.mubr.f32.gmra.mxu0 %v752
  %v754 = vpop.f32.mrf.mxu0
  %v755 = vadd.f32 %v533, %v754
  %v756 = vpop.f32.mrf.mxu0
  %757 = vmatprep.mubr.f32.mxu0 0.0
  %v758 = vand.u32 %v61, 4294901760
  %v759 = vsub.f32 %v61, %v758
  %760 = vmatmul.mubr.f32.gmra.mxu0 %v759
  %v761 = vpop.f32.mrf.mxu0
  %v762 = vadd.f32 %v539, %v761
  %v763 = vpop.f32.mrf.mxu0
  %764 = vmatprep.mubr.f32.mxu0 0.0
  %v765 = vand.u32 %v64, 4294901760
  %v766 = vsub.f32 %v64, %v765
  %767 = vmatmul.mubr.f32.gmra.mxu0 %v766
  %v768 = vpop.f32.mrf.mxu0
  %v769 = vadd.f32 %v545, %v768
  %v770 = vpop.f32.mrf.mxu0
  %771 = vmatprep.mubr.f32.mxu0 0.0
  %v772 = vand.u32 %v67, 4294901760
  %v773 = vsub.f32 %v67, %v772
  %774 = vmatmul.mubr.f32.gmra.mxu0 %v773
  %v775 = vpop.f32.mrf.mxu0
  %v776 = vadd.f32 %v551, %v775
  %v777 = vpop.f32.mrf.mxu0
  %778 = vmatprep.mubr.f32.mxu0 0.0
  %v779 = vand.u32 %v70, 4294901760
  %v780 = vsub.f32 %v70, %v779
  %781 = vmatmul.mubr.f32.gmra.mxu0 %v780
  %v782 = vpop.f32.mrf.mxu0
  %v783 = vadd.f32 %v557, %v782
  %v784 = vpop.f32.mrf.mxu0
  %785 = vmatprep.mubr.f32.mxu0 0.0
  %v786 = vand.u32 %v73, 4294901760
  %v787 = vsub.f32 %v73, %v786
  %788 = vmatmul.mubr.f32.gmra.mxu0 %v787
  %v789 = vpop.f32.mrf.mxu0
  %v790 = vadd.f32 %v563, %v789
  %v791 = vpop.f32.mrf.mxu0
  %792 = vmatprep.mubr.f32.mxu0 0.0
  %v793 = vand.u32 %v76, 4294901760
  %v794 = vsub.f32 %v76, %v793
  %795 = vmatmul.mubr.f32.gmra.mxu0 %v794
  %v796 = vpop.f32.mrf.mxu0
  %v797 = vadd.f32 %v569, %v796
  %v798 = vpop.f32.mrf.mxu0
  %799 = vmatprep.mubr.f32.mxu0 0.0
  %v800 = vand.u32 %v79, 4294901760
  %v801 = vsub.f32 %v79, %v800
  %802 = vmatmul.mubr.f32.gmra.mxu0 %v801
  %v803 = vpop.f32.mrf.mxu0
  %v804 = vadd.f32 %v575, %v803
  %v805 = vpop.f32.mrf.mxu0
  %806 = vmatprep.mubr.f32.mxu0 0.0
  %v807 = vand.u32 %v82, 4294901760
  %v808 = vsub.f32 %v82, %v807
  %809 = vmatmul.mubr.f32.gmra.mxu0 %v808
  %v810 = vpop.f32.mrf.mxu0
  %v811 = vadd.f32 %v581, %v810
  %v812 = vpop.f32.mrf.mxu0
  %813 = vmatprep.mubr.f32.mxu0 0.0
  %v814 = vand.u32 %v85, 4294901760
  %v815 = vsub.f32 %v85, %v814
  %816 = vmatmul.mubr.f32.gmra.mxu0 %v815
  %v817 = vpop.f32.mrf.mxu0
  %v818 = vadd.f32 %v587, %v817
  %v819 = vpop.f32.mrf.mxu0
  %820 = vmatprep.mubr.f32.mxu0 0.0
  %v821 = vand.u32 %v88, 4294901760
  %v822 = vsub.f32 %v88, %v821
  %823 = vmatmul.mubr.f32.gmra.mxu0 %v822
  %v824 = vpop.f32.mrf.mxu0
  %v825 = vadd.f32 %v593, %v824
  %v826 = vpop.f32.mrf.mxu0
  %827 = vmatprep.mubr.f32.mxu0 0.0
  %v828 = vand.u32 %v91, 4294901760
  %v829 = vsub.f32 %v91, %v828
  %830 = vmatmul.mubr.f32.gmra.mxu0 %v829
  %v831 = vpop.f32.mrf.mxu0
  %v832 = vadd.f32 %v599, %v831
  %v833 = vpop.f32.mrf.mxu0
  %834 = vmatprep.mubr.f32.mxu0 0.0
  %v835 = vand.u32 %v94, 4294901760
  %v836 = vsub.f32 %v94, %v835
  %837 = vmatmul.mubr.f32.gmra.mxu0 %v836
  %v838 = vpop.f32.mrf.mxu0
  %v839 = vadd.f32 %v605, %v838
  %v840 = vpop.f32.mrf.mxu0
  %841 = vmatprep.mubr.f32.mxu0 0.0
  %v842 = vand.u32 %v97, 4294901760
  %v843 = vsub.f32 %v97, %v842
  %844 = vmatmul.mubr.f32.gmra.mxu0 %v843
  %v845 = vpop.f32.mrf.mxu0
  %v846 = vadd.f32 %v611, %v845
  %v847 = vpop.f32.mrf.mxu0
  %848 = vmatprep.mubr.f32.mxu0 0.0
  %v849 = vand.u32 %v100, 4294901760
  %v850 = vsub.f32 %v100, %v849
  %851 = vmatmul.mubr.f32.gmra.mxu0 %v850
  %v852 = vpop.f32.mrf.mxu0
  %v853 = vadd.f32 %v617, %v852
  %v854 = vpop.f32.mrf.mxu0
  %855 = vmatprep.mubr.f32.mxu0 0.0
  %v856 = vand.u32 %v103, 4294901760
  %v857 = vsub.f32 %v103, %v856
  %858 = vmatmul.mubr.f32.gmra.mxu0 %v857
  %v859 = vpop.f32.mrf.mxu0
  %v860 = vadd.f32 %v623, %v859
  %v861 = vpop.f32.mrf.mxu0
  %862 = vmatprep.mubr.f32.mxu0 0.0
  %v863 = vand.u32 %v106, 4294901760
  %v864 = vsub.f32 %v106, %v863
  %865 = vmatmul.mubr.f32.gmra.mxu0 %v864
  %v866 = vpop.f32.mrf.mxu0
  %v867 = vadd.f32 %v629, %v866
  %v868 = vpop.f32.mrf.mxu0
  %869 = vmatprep.mubr.f32.mxu0 0.0
  %v870 = vand.u32 %v109, 4294901760
  %v871 = vsub.f32 %v109, %v870
  %872 = vmatmul.mubr.f32.gmra.mxu0 %v871
  %v873 = vpop.f32.mrf.mxu0
  %v874 = vadd.f32 %v635, %v873
  %v875 = vpop.f32.mrf.mxu0
  %876 = vmatprep.mubr.f32.mxu0 0.0
  %v877 = vand.u32 %v112, 4294901760
  %v878 = vsub.f32 %v112, %v877
  %879 = vmatmul.mubr.f32.gmra.mxu0 %v878
  %v880 = vpop.f32.mrf.mxu0
  %v881 = vadd.f32 %v641, %v880
  %v882 = vpop.f32.mrf.mxu0
  %883 = vmatprep.mubr.f32.mxu0 0.0
  %v884 = vand.u32 %v115, 4294901760
  %v885 = vsub.f32 %v115, %v884
  %886 = vmatmul.mubr.f32.gmra.mxu0 %v885
  %v887 = vpop.f32.mrf.mxu0
  %v888 = vadd.f32 %v647, %v887
  %v889 = vpop.f32.mrf.mxu0
  %890 = vmatprep.mubr.f32.mxu0 0.0
  %v891 = vand.u32 %v118, 4294901760
  %v892 = vsub.f32 %v118, %v891
  %893 = vmatmul.mubr.f32.gmra.mxu0 %v892
  %v894 = vpop.f32.mrf.mxu0
  %v895 = vadd.f32 %v653, %v894
  %v896 = vpop.f32.mrf.mxu0
  %897 = vdwg.mxu0
  %898 = vmatprep.subr.mxu0 0.0
  %899 = vmatpush1.msra.mxu0 0.0
  %900 = vmatprep.subr.mxu0 0.0
  %901 = vmatpush1.msra.mxu0 0.0
  %902 = vmatprep.subr.mxu0 0.0
  %903 = vmatpush1.msra.mxu0 0.0
  %904 = vmatprep.subr.mxu0 0.0
  %905 = vmatpush1.msra.mxu0 0.0
  %906 = vmatprep.subr.mxu0 0.0
  %907 = vmatpush1.msra.mxu0 0.0
  %908 = vmatprep.subr.mxu0 0.0
  %909 = vmatpush1.msra.mxu0 0.0
  %910 = vmatprep.subr.mxu0 0.0
  %911 = vmatpush1.msra.mxu0 0.0
  %912 = vmatprep.subr.mxu0 0.0
  %913 = vmatpush1.msra.mxu0 0.0
  %914 = vmatprep.subr.mxu0 0.0
  %915 = vmatpush1.msra.mxu0 0.0
  %916 = vmatprep.subr.mxu0 0.0
  %917 = vmatpush1.msra.mxu0 0.0
  %918 = vmatprep.subr.mxu0 0.0
  %919 = vmatpush1.msra.mxu0 0.0
  %920 = vmatprep.subr.mxu0 0.0
  %921 = vmatpush1.msra.mxu0 0.0
  %922 = vmatprep.subr.mxu0 0.0
  %923 = vmatpush1.msra.mxu0 0.0
  %924 = vmatprep.subr.mxu0 0.0
  %925 = vmatpush1.msra.mxu0 0.0
  %926 = vmatprep.subr.mxu0 0.0
  %927 = vmatpush1.msra.mxu0 0.0
  %928 = vmatprep.subr.mxu0 0.0
  %v929 = vand.u32 %v43, 4294901760
  %930 = vmatpush1.msra.mxu0 %v929
  %931 = vmatprep.subr.mxu0 0.0
  %932 = vmatpush2.msra.mxu0 0.0
  %933 = vmatprep.subr.mxu0 0.0
  %934 = vmatpush2.msra.mxu0 0.0
  %935 = vmatprep.subr.mxu0 0.0
  %936 = vmatpush2.msra.mxu0 0.0
  %937 = vmatprep.subr.mxu0 0.0
  %938 = vmatpush2.msra.mxu0 0.0
  %939 = vmatprep.subr.mxu0 0.0
  %940 = vmatpush2.msra.mxu0 0.0
  %941 = vmatprep.subr.mxu0 0.0
  %942 = vmatpush2.msra.mxu0 0.0
  %943 = vmatprep.subr.mxu0 0.0
  %944 = vmatpush2.msra.mxu0 0.0
  %945 = vmatprep.subr.mxu0 0.0
  %946 = vmatpush2.msra.mxu0 0.0
  %947 = vmatprep.subr.mxu0 0.0
  %948 = vmatpush2.msra.mxu0 0.0
  %949 = vmatprep.subr.mxu0 0.0
  %950 = vmatpush2.msra.mxu0 0.0
  %951 = vmatprep.subr.mxu0 0.0
  %952 = vmatpush2.msra.mxu0 0.0
  %953 = vmatprep.subr.mxu0 0.0
  %954 = vmatpush2.msra.mxu0 0.0
  %955 = vmatprep.subr.mxu0 0.0
  %956 = vmatpush2.msra.mxu0 0.0
  %957 = vmatprep.subr.mxu0 0.0
  %958 = vmatpush2.msra.mxu0 0.0
  %959 = vmatprep.subr.mxu0 0.0
  %960 = vmatpush2.msra.mxu0 0.0
  %961 = vmatprep.subr.mxu0 0.0
  %962 = vmatpush2.msra.mxu0 0.0
  %963 = vmatprep.mubr.f32.mxu0 0.0
  %v964 = vand.u32 %v46, 4294901760
  %v965 = vsub.f32 %v46, %v964
  %v966 = vand.u32 %v965, 4294901760
  %967 = vmatmul.mubr.f32.gmra.mxu0 %v966
  %v968 = vpop.f32.mrf.mxu0
  %v969 = vadd.f32 %v727, %v968
  %v970 = vpop.f32.mrf.mxu0
  %971 = vmatprep.mubr.f32.mxu0 0.0
  %v972 = vand.u32 %v49, 4294901760
  %v973 = vsub.f32 %v49, %v972
  %v974 = vand.u32 %v973, 4294901760
  %975 = vmatmul.mubr.f32.gmra.mxu0 %v974
  %v976 = vpop.f32.mrf.mxu0
  %v977 = vadd.f32 %v734, %v976
  %v978 = vpop.f32.mrf.mxu0
  %979 = vmatprep.mubr.f32.mxu0 0.0
  %v980 = vand.u32 %v52, 4294901760
  %v981 = vsub.f32 %v52, %v980
  %v982 = vand.u32 %v981, 4294901760
  %983 = vmatmul.mubr.f32.gmra.mxu0 %v982
  %v984 = vpop.f32.mrf.mxu0
  %v985 = vadd.f32 %v741, %v984
  %v986 = vpop.f32.mrf.mxu0
  %987 = vmatprep.mubr.f32.mxu0 0.0
  %v988 = vand.u32 %v55, 4294901760
  %v989 = vsub.f32 %v55, %v988
  %v990 = vand.u32 %v989, 4294901760
  %991 = vmatmul.mubr.f32.gmra.mxu0 %v990
  %v992 = vpop.f32.mrf.mxu0
  %v993 = vadd.f32 %v748, %v992
  %v994 = vpop.f32.mrf.mxu0
  %995 = vmatprep.mubr.f32.mxu0 0.0
  %v996 = vand.u32 %v58, 4294901760
  %v997 = vsub.f32 %v58, %v996
  %v998 = vand.u32 %v997, 4294901760
  %999 = vmatmul.mubr.f32.gmra.mxu0 %v998
  %v1000 = vpop.f32.mrf.mxu0
  %v1001 = vadd.f32 %v755, %v1000
  %v1002 = vpop.f32.mrf.mxu0
  %1003 = vmatprep.mubr.f32.mxu0 0.0
  %v1004 = vand.u32 %v61, 4294901760
  %v1005 = vsub.f32 %v61, %v1004
  %v1006 = vand.u32 %v1005, 4294901760
  %1007 = vmatmul.mubr.f32.gmra.mxu0 %v1006
  %v1008 = vpop.f32.mrf.mxu0
  %v1009 = vadd.f32 %v762, %v1008
  %v1010 = vpop.f32.mrf.mxu0
  %1011 = vmatprep.mubr.f32.mxu0 0.0
  %v1012 = vand.u32 %v64, 4294901760
  %v1013 = vsub.f32 %v64, %v1012
  %v1014 = vand.u32 %v1013, 4294901760
  %1015 = vmatmul.mubr.f32.gmra.mxu0 %v1014
  %v1016 = vpop.f32.mrf.mxu0
  %v1017 = vadd.f32 %v769, %v1016
  %v1018 = vpop.f32.mrf.mxu0
  %1019 = vmatprep.mubr.f32.mxu0 0.0
  %v1020 = vand.u32 %v67, 4294901760
  %v1021 = vsub.f32 %v67, %v1020
  %v1022 = vand.u32 %v1021, 4294901760
  %1023 = vmatmul.mubr.f32.gmra.mxu0 %v1022
  %v1024 = vpop.f32.mrf.mxu0
  %v1025 = vadd.f32 %v776, %v1024
  %v1026 = vpop.f32.mrf.mxu0
  %1027 = vmatprep.mubr.f32.mxu0 0.0
  %v1028 = vand.u32 %v70, 4294901760
  %v1029 = vsub.f32 %v70, %v1028
  %v1030 = vand.u32 %v1029, 4294901760
  %1031 = vmatmul.mubr.f32.gmra.mxu0 %v1030
  %v1032 = vpop.f32.mrf.mxu0
  %v1033 = vadd.f32 %v783, %v1032
  %v1034 = vpop.f32.mrf.mxu0
  %1035 = vmatprep.mubr.f32.mxu0 0.0
  %v1036 = vand.u32 %v73, 4294901760
  %v1037 = vsub.f32 %v73, %v1036
  %v1038 = vand.u32 %v1037, 4294901760
  %1039 = vmatmul.mubr.f32.gmra.mxu0 %v1038
  %v1040 = vpop.f32.mrf.mxu0
  %v1041 = vadd.f32 %v790, %v1040
  %v1042 = vpop.f32.mrf.mxu0
  %1043 = vmatprep.mubr.f32.mxu0 0.0
  %v1044 = vand.u32 %v76, 4294901760
  %v1045 = vsub.f32 %v76, %v1044
  %v1046 = vand.u32 %v1045, 4294901760
  %1047 = vmatmul.mubr.f32.gmra.mxu0 %v1046
  %v1048 = vpop.f32.mrf.mxu0
  %v1049 = vadd.f32 %v797, %v1048
  %v1050 = vpop.f32.mrf.mxu0
  %1051 = vmatprep.mubr.f32.mxu0 0.0
  %v1052 = vand.u32 %v79, 4294901760
  %v1053 = vsub.f32 %v79, %v1052
  %v1054 = vand.u32 %v1053, 4294901760
  %1055 = vmatmul.mubr.f32.gmra.mxu0 %v1054
  %v1056 = vpop.f32.mrf.mxu0
  %v1057 = vadd.f32 %v804, %v1056
  %v1058 = vpop.f32.mrf.mxu0
  %1059 = vmatprep.mubr.f32.mxu0 0.0
  %v1060 = vand.u32 %v82, 4294901760
  %v1061 = vsub.f32 %v82, %v1060
  %v1062 = vand.u32 %v1061, 4294901760
  %1063 = vmatmul.mubr.f32.gmra.mxu0 %v1062
  %v1064 = vpop.f32.mrf.mxu0
  %v1065 = vadd.f32 %v811, %v1064
  %v1066 = vpop.f32.mrf.mxu0
  %1067 = vmatprep.mubr.f32.mxu0 0.0
  %v1068 = vand.u32 %v85, 4294901760
  %v1069 = vsub.f32 %v85, %v1068
  %v1070 = vand.u32 %v1069, 4294901760
  %1071 = vmatmul.mubr.f32.gmra.mxu0 %v1070
  %v1072 = vpop.f32.mrf.mxu0
  %v1073 = vadd.f32 %v818, %v1072
  %v1074 = vpop.f32.mrf.mxu0
  %1075 = vmatprep.mubr.f32.mxu0 0.0
  %v1076 = vand.u32 %v88, 4294901760
  %v1077 = vsub.f32 %v88, %v1076
  %v1078 = vand.u32 %v1077, 4294901760
  %1079 = vmatmul.mubr.f32.gmra.mxu0 %v1078
  %v1080 = vpop.f32.mrf.mxu0
  %v1081 = vadd.f32 %v825, %v1080
  %v1082 = vpop.f32.mrf.mxu0
  %1083 = vmatprep.mubr.f32.mxu0 0.0
  %v1084 = vand.u32 %v91, 4294901760
  %v1085 = vsub.f32 %v91, %v1084
  %v1086 = vand.u32 %v1085, 4294901760
  %1087 = vmatmul.mubr.f32.gmra.mxu0 %v1086
  %v1088 = vpop.f32.mrf.mxu0
  %v1089 = vadd.f32 %v832, %v1088
  %v1090 = vpop.f32.mrf.mxu0
  %1091 = vmatprep.mubr.f32.mxu0 0.0
  %v1092 = vand.u32 %v94, 4294901760
  %v1093 = vsub.f32 %v94, %v1092
  %v1094 = vand.u32 %v1093, 4294901760
  %1095 = vmatmul.mubr.f32.gmra.mxu0 %v1094
  %v1096 = vpop.f32.mrf.mxu0
  %v1097 = vadd.f32 %v839, %v1096
  %v1098 = vpop.f32.mrf.mxu0
  %1099 = vmatprep.mubr.f32.mxu0 0.0
  %v1100 = vand.u32 %v97, 4294901760
  %v1101 = vsub.f32 %v97, %v1100
  %v1102 = vand.u32 %v1101, 4294901760
  %1103 = vmatmul.mubr.f32.gmra.mxu0 %v1102
  %v1104 = vpop.f32.mrf.mxu0
  %v1105 = vadd.f32 %v846, %v1104
  %v1106 = vpop.f32.mrf.mxu0
  %1107 = vmatprep.mubr.f32.mxu0 0.0
  %v1108 = vand.u32 %v100, 4294901760
  %v1109 = vsub.f32 %v100, %v1108
  %v1110 = vand.u32 %v1109, 4294901760
  %1111 = vmatmul.mubr.f32.gmra.mxu0 %v1110
  %v1112 = vpop.f32.mrf.mxu0
  %v1113 = vadd.f32 %v853, %v1112
  %v1114 = vpop.f32.mrf.mxu0
  %1115 = vmatprep.mubr.f32.mxu0 0.0
  %v1116 = vand.u32 %v103, 4294901760
  %v1117 = vsub.f32 %v103, %v1116
  %v1118 = vand.u32 %v1117, 4294901760
  %1119 = vmatmul.mubr.f32.gmra.mxu0 %v1118
  %v1120 = vpop.f32.mrf.mxu0
  %v1121 = vadd.f32 %v860, %v1120
  %v1122 = vpop.f32.mrf.mxu0
  %1123 = vmatprep.mubr.f32.mxu0 0.0
  %v1124 = vand.u32 %v106, 4294901760
  %v1125 = vsub.f32 %v106, %v1124
  %v1126 = vand.u32 %v1125, 4294901760
  %1127 = vmatmul.mubr.f32.gmra.mxu0 %v1126
  %v1128 = vpop.f32.mrf.mxu0
  %v1129 = vadd.f32 %v867, %v1128
  %v1130 = vpop.f32.mrf.mxu0
  %1131 = vmatprep.mubr.f32.mxu0 0.0
  %v1132 = vand.u32 %v109, 4294901760
  %v1133 = vsub.f32 %v109, %v1132
  %v1134 = vand.u32 %v1133, 4294901760
  %1135 = vmatmul.mubr.f32.gmra.mxu0 %v1134
  %v1136 = vpop.f32.mrf.mxu0
  %v1137 = vadd.f32 %v874, %v1136
  %v1138 = vpop.f32.mrf.mxu0
  %1139 = vmatprep.mubr.f32.mxu0 0.0
  %v1140 = vand.u32 %v112, 4294901760
  %v1141 = vsub.f32 %v112, %v1140
  %v1142 = vand.u32 %v1141, 4294901760
  %1143 = vmatmul.mubr.f32.gmra.mxu0 %v1142
  %v1144 = vpop.f32.mrf.mxu0
  %v1145 = vadd.f32 %v881, %v1144
  %v1146 = vpop.f32.mrf.mxu0
  %1147 = vmatprep.mubr.f32.mxu0 0.0
  %v1148 = vand.u32 %v115, 4294901760
  %v1149 = vsub.f32 %v115, %v1148
  %v1150 = vand.u32 %v1149, 4294901760
  %1151 = vmatmul.mubr.f32.gmra.mxu0 %v1150
  %v1152 = vpop.f32.mrf.mxu0
  %v1153 = vadd.f32 %v888, %v1152
  %v1154 = vpop.f32.mrf.mxu0
  %1155 = vmatprep.mubr.f32.mxu0 0.0
  %v1156 = vand.u32 %v118, 4294901760
  %v1157 = vsub.f32 %v118, %v1156
  %v1158 = vand.u32 %v1157, 4294901760
  %1159 = vmatmul.mubr.f32.gmra.mxu0 %v1158
  %v1160 = vpop.f32.mrf.mxu0
  %v1161 = vadd.f32 %v895, %v1160
  %v1162 = vpop.f32.mrf.mxu0
  %1163 = vdwg.mxu0
  %1164 = vmatprep.subr.mxu0 0.0
  %1165 = vmatpush1.msra.mxu0 0.0
  %1166 = vmatprep.subr.mxu0 0.0
  %1167 = vmatpush1.msra.mxu0 0.0
  %1168 = vmatprep.subr.mxu0 0.0
  %1169 = vmatpush1.msra.mxu0 0.0
  %1170 = vmatprep.subr.mxu0 0.0
  %1171 = vmatpush1.msra.mxu0 0.0
  %1172 = vmatprep.subr.mxu0 0.0
  %1173 = vmatpush1.msra.mxu0 0.0
  %1174 = vmatprep.subr.mxu0 0.0
  %1175 = vmatpush1.msra.mxu0 0.0
  %1176 = vmatprep.subr.mxu0 0.0
  %1177 = vmatpush1.msra.mxu0 0.0
  %1178 = vmatprep.subr.mxu0 0.0
  %1179 = vmatpush1.msra.mxu0 0.0
  %1180 = vmatprep.subr.mxu0 0.0
  %1181 = vmatpush1.msra.mxu0 0.0
  %1182 = vmatprep.subr.mxu0 0.0
  %1183 = vmatpush1.msra.mxu0 0.0
  %1184 = vmatprep.subr.mxu0 0.0
  %1185 = vmatpush1.msra.mxu0 0.0
  %1186 = vmatprep.subr.mxu0 0.0
  %1187 = vmatpush1.msra.mxu0 0.0
  %1188 = vmatprep.subr.mxu0 0.0
  %1189 = vmatpush1.msra.mxu0 0.0
  %1190 = vmatprep.subr.mxu0 0.0
  %1191 = vmatpush1.msra.mxu0 0.0
  %1192 = vmatprep.subr.mxu0 0.0
  %1193 = vmatpush1.msra.mxu0 0.0
  %1194 = vmatprep.subr.mxu0 0.0
  %v1195 = vand.u32 %v43, 4294901760
  %v1196 = vsub.f32 %v43, %v1195
  %v1197 = vand.u32 %v1196, 4294901760
  %1198 = vmatpush1.msra.mxu0 %v1197
  %1199 = vmatprep.subr.mxu0 0.0
  %1200 = vmatpush2.msra.mxu0 0.0
  %1201 = vmatprep.subr.mxu0 0.0
  %1202 = vmatpush2.msra.mxu0 0.0
  %1203 = vmatprep.subr.mxu0 0.0
  %1204 = vmatpush2.msra.mxu0 0.0
  %1205 = vmatprep.subr.mxu0 0.0
  %1206 = vmatpush2.msra.mxu0 0.0
  %1207 = vmatprep.subr.mxu0 0.0
  %1208 = vmatpush2.msra.mxu0 0.0
  %1209 = vmatprep.subr.mxu0 0.0
  %1210 = vmatpush2.msra.mxu0 0.0
  %1211 = vmatprep.subr.mxu0 0.0
  %1212 = vmatpush2.msra.mxu0 0.0
  %1213 = vmatprep.subr.mxu0 0.0
  %1214 = vmatpush2.msra.mxu0 0.0
  %1215 = vmatprep.subr.mxu0 0.0
  %1216 = vmatpush2.msra.mxu0 0.0
  %1217 = vmatprep.subr.mxu0 0.0
  %1218 = vmatpush2.msra.mxu0 0.0
  %1219 = vmatprep.subr.mxu0 0.0
  %1220 = vmatpush2.msra.mxu0 0.0
  %1221 = vmatprep.subr.mxu0 0.0
  %1222 = vmatpush2.msra.mxu0 0.0
  %1223 = vmatprep.subr.mxu0 0.0
  %1224 = vmatpush2.msra.mxu0 0.0
  %1225 = vmatprep.subr.mxu0 0.0
  %1226 = vmatpush2.msra.mxu0 0.0
  %1227 = vmatprep.subr.mxu0 0.0
  %1228 = vmatpush2.msra.mxu0 0.0
  %1229 = vmatprep.subr.mxu0 0.0
  %1230 = vmatpush2.msra.mxu0 0.0
  %1231 = vmatprep.mubr.f32.mxu0 0.0
  %v1232 = vand.u32 %v46, 4294901760
  %1233 = vmatmul.mubr.f32.gmra.mxu0 %v1232
  %v1234 = vpop.f32.mrf.mxu0
  %v1235 = vadd.f32 %v969, %v1234
  %v1236 = vpop.f32.mrf.mxu0
  %1237 = vmatprep.mubr.f32.mxu0 0.0
  %v1238 = vand.u32 %v49, 4294901760
  %1239 = vmatmul.mubr.f32.gmra.mxu0 %v1238
  %v1240 = vpop.f32.mrf.mxu0
  %v1241 = vadd.f32 %v977, %v1240
  %v1242 = vpop.f32.mrf.mxu0
  %1243 = vmatprep.mubr.f32.mxu0 0.0
  %v1244 = vand.u32 %v52, 4294901760
  %1245 = vmatmul.mubr.f32.gmra.mxu0 %v1244
  %v1246 = vpop.f32.mrf.mxu0
  %v1247 = vadd.f32 %v985, %v1246
  %v1248 = vpop.f32.mrf.mxu0
  %1249 = vmatprep.mubr.f32.mxu0 0.0
  %v1250 = vand.u32 %v55, 4294901760
  %1251 = vmatmul.mubr.f32.gmra.mxu0 %v1250
  %v1252 = vpop.f32.mrf.mxu0
  %v1253 = vadd.f32 %v993, %v1252
  %v1254 = vpop.f32.mrf.mxu0
  %1255 = vmatprep.mubr.f32.mxu0 0.0
  %v1256 = vand.u32 %v58, 4294901760
  %1257 = vmatmul.mubr.f32.gmra.mxu0 %v1256
  %v1258 = vpop.f32.mrf.mxu0
  %v1259 = vadd.f32 %v1001, %v1258
  %v1260 = vpop.f32.mrf.mxu0
  %1261 = vmatprep.mubr.f32.mxu0 0.0
  %v1262 = vand.u32 %v61, 4294901760
  %1263 = vmatmul.mubr.f32.gmra.mxu0 %v1262
  %v1264 = vpop.f32.mrf.mxu0
  %v1265 = vadd.f32 %v1009, %v1264
  %v1266 = vpop.f32.mrf.mxu0
  %1267 = vmatprep.mubr.f32.mxu0 0.0
  %v1268 = vand.u32 %v64, 4294901760
  %1269 = vmatmul.mubr.f32.gmra.mxu0 %v1268
  %v1270 = vpop.f32.mrf.mxu0
  %v1271 = vadd.f32 %v1017, %v1270
  %v1272 = vpop.f32.mrf.mxu0
  %1273 = vmatprep.mubr.f32.mxu0 0.0
  %v1274 = vand.u32 %v67, 4294901760
  %1275 = vmatmul.mubr.f32.gmra.mxu0 %v1274
  %v1276 = vpop.f32.mrf.mxu0
  %v1277 = vadd.f32 %v1025, %v1276
  %v1278 = vpop.f32.mrf.mxu0
  %1279 = vmatprep.mubr.f32.mxu0 0.0
  %v1280 = vand.u32 %v70, 4294901760
  %1281 = vmatmul.mubr.f32.gmra.mxu0 %v1280
  %v1282 = vpop.f32.mrf.mxu0
  %v1283 = vadd.f32 %v1033, %v1282
  %v1284 = vpop.f32.mrf.mxu0
  %1285 = vmatprep.mubr.f32.mxu0 0.0
  %v1286 = vand.u32 %v73, 4294901760
  %1287 = vmatmul.mubr.f32.gmra.mxu0 %v1286
  %v1288 = vpop.f32.mrf.mxu0
  %v1289 = vadd.f32 %v1041, %v1288
  %v1290 = vpop.f32.mrf.mxu0
  %1291 = vmatprep.mubr.f32.mxu0 0.0
  %v1292 = vand.u32 %v76, 4294901760
  %1293 = vmatmul.mubr.f32.gmra.mxu0 %v1292
  %v1294 = vpop.f32.mrf.mxu0
  %v1295 = vadd.f32 %v1049, %v1294
  %v1296 = vpop.f32.mrf.mxu0
  %1297 = vmatprep.mubr.f32.mxu0 0.0
  %v1298 = vand.u32 %v79, 4294901760
  %1299 = vmatmul.mubr.f32.gmra.mxu0 %v1298
  %v1300 = vpop.f32.mrf.mxu0
  %v1301 = vadd.f32 %v1057, %v1300
  %v1302 = vpop.f32.mrf.mxu0
  %1303 = vmatprep.mubr.f32.mxu0 0.0
  %v1304 = vand.u32 %v82, 4294901760
  %1305 = vmatmul.mubr.f32.gmra.mxu0 %v1304
  %v1306 = vpop.f32.mrf.mxu0
  %v1307 = vadd.f32 %v1065, %v1306
  %v1308 = vpop.f32.mrf.mxu0
  %1309 = vmatprep.mubr.f32.mxu0 0.0
  %v1310 = vand.u32 %v85, 4294901760
  %1311 = vmatmul.mubr.f32.gmra.mxu0 %v1310
  %v1312 = vpop.f32.mrf.mxu0
  %v1313 = vadd.f32 %v1073, %v1312
  %v1314 = vpop.f32.mrf.mxu0
  %1315 = vmatprep.mubr.f32.mxu0 0.0
  %v1316 = vand.u32 %v88, 4294901760
  %1317 = vmatmul.mubr.f32.gmra.mxu0 %v1316
  %v1318 = vpop.f32.mrf.mxu0
  %v1319 = vadd.f32 %v1081, %v1318
  %v1320 = vpop.f32.mrf.mxu0
  %1321 = vmatprep.mubr.f32.mxu0 0.0
  %v1322 = vand.u32 %v91, 4294901760
  %1323 = vmatmul.mubr.f32.gmra.mxu0 %v1322
  %v1324 = vpop.f32.mrf.mxu0
  %v1325 = vadd.f32 %v1089, %v1324
  %v1326 = vpop.f32.mrf.mxu0
  %1327 = vmatprep.mubr.f32.mxu0 0.0
  %v1328 = vand.u32 %v94, 4294901760
  %1329 = vmatmul.mubr.f32.gmra.mxu0 %v1328
  %v1330 = vpop.f32.mrf.mxu0
  %v1331 = vadd.f32 %v1097, %v1330
  %v1332 = vpop.f32.mrf.mxu0
  %1333 = vmatprep.mubr.f32.mxu0 0.0
  %v1334 = vand.u32 %v97, 4294901760
  %1335 = vmatmul.mubr.f32.gmra.mxu0 %v1334
  %v1336 = vpop.f32.mrf.mxu0
  %v1337 = vadd.f32 %v1105, %v1336
  %v1338 = vpop.f32.mrf.mxu0
  %1339 = vmatprep.mubr.f32.mxu0 0.0
  %v1340 = vand.u32 %v100, 4294901760
  %1341 = vmatmul.mubr.f32.gmra.mxu0 %v1340
  %v1342 = vpop.f32.mrf.mxu0
  %v1343 = vadd.f32 %v1113, %v1342
  %v1344 = vpop.f32.mrf.mxu0
  %1345 = vmatprep.mubr.f32.mxu0 0.0
  %v1346 = vand.u32 %v103, 4294901760
  %1347 = vmatmul.mubr.f32.gmra.mxu0 %v1346
  %v1348 = vpop.f32.mrf.mxu0
  %v1349 = vadd.f32 %v1121, %v1348
  %v1350 = vpop.f32.mrf.mxu0
  %1351 = vmatprep.mubr.f32.mxu0 0.0
  %v1352 = vand.u32 %v106, 4294901760
  %1353 = vmatmul.mubr.f32.gmra.mxu0 %v1352
  %v1354 = vpop.f32.mrf.mxu0
  %v1355 = vadd.f32 %v1129, %v1354
  %v1356 = vpop.f32.mrf.mxu0
  %1357 = vmatprep.mubr.f32.mxu0 0.0
  %v1358 = vand.u32 %v109, 4294901760
  %1359 = vmatmul.mubr.f32.gmra.mxu0 %v1358
  %v1360 = vpop.f32.mrf.mxu0
  %v1361 = vadd.f32 %v1137, %v1360
  %v1362 = vpop.f32.mrf.mxu0
  %1363 = vmatprep.mubr.f32.mxu0 0.0
  %v1364 = vand.u32 %v112, 4294901760
  %1365 = vmatmul.mubr.f32.gmra.mxu0 %v1364
  %v1366 = vpop.f32.mrf.mxu0
  %v1367 = vadd.f32 %v1145, %v1366
  %v1368 = vpop.f32.mrf.mxu0
  %1369 = vmatprep.mubr.f32.mxu0 0.0
  %v1370 = vand.u32 %v115, 4294901760
  %1371 = vmatmul.mubr.f32.gmra.mxu0 %v1370
  %v1372 = vpop.f32.mrf.mxu0
  %v1373 = vadd.f32 %v1153, %v1372
  %v1374 = vpop.f32.mrf.mxu0
  %1375 = vmatprep.mubr.f32.mxu0 0.0
  %v1376 = vand.u32 %v118, 4294901760
  %1377 = vmatmul.mubr.f32.gmra.mxu0 %v1376
  %v1378 = vpop.f32.mrf.mxu0
  %v1379 = vadd.f32 %v1161, %v1378
  %v1380 = vpop.f32.mrf.mxu0
  %1381 = vdwg.mxu0
  %1382 = vmatprep.subr.mxu0 0.0
  %1383 = vmatpush1.msra.mxu0 0.0
  %1384 = vmatprep.subr.mxu0 0.0
  %1385 = vmatpush1.msra.mxu0 0.0
  %1386 = vmatprep.subr.mxu0 0.0
  %1387 = vmatpush1.msra.mxu0 0.0
  %1388 = vmatprep.subr.mxu0 0.0
  %1389 = vmatpush1.msra.mxu0 0.0
  %1390 = vmatprep.subr.mxu0 0.0
  %1391 = vmatpush1.msra.mxu0 0.0
  %1392 = vmatprep.subr.mxu0 0.0
  %1393 = vmatpush1.msra.mxu0 0.0
  %1394 = vmatprep.subr.mxu0 0.0
  %1395 = vmatpush1.msra.mxu0 0.0
  %1396 = vmatprep.subr.mxu0 0.0
  %1397 = vmatpush1.msra.mxu0 0.0
  %1398 = vmatprep.subr.mxu0 0.0
  %1399 = vmatpush1.msra.mxu0 0.0
  %1400 = vmatprep.subr.mxu0 0.0
  %1401 = vmatpush1.msra.mxu0 0.0
  %1402 = vmatprep.subr.mxu0 0.0
  %1403 = vmatpush1.msra.mxu0 0.0
  %1404 = vmatprep.subr.mxu0 0.0
  %1405 = vmatpush1.msra.mxu0 0.0
  %1406 = vmatprep.subr.mxu0 0.0
  %1407 = vmatpush1.msra.mxu0 0.0
  %1408 = vmatprep.subr.mxu0 0.0
  %1409 = vmatpush1.msra.mxu0 0.0
  %1410 = vmatprep.subr.mxu0 0.0
  %1411 = vmatpush1.msra.mxu0 0.0
  %1412 = vmatprep.subr.mxu0 0.0
  %v1413 = vand.u32 %v43, 4294901760
  %1414 = vmatpush1.msra.mxu0 %v1413
  %1415 = vmatprep.subr.mxu0 0.0
  %1416 = vmatpush2.msra.mxu0 0.0
  %1417 = vmatprep.subr.mxu0 0.0
  %1418 = vmatpush2.msra.mxu0 0.0
  %1419 = vmatprep.subr.mxu0 0.0
  %1420 = vmatpush2.msra.mxu0 0.0
  %1421 = vmatprep.subr.mxu0 0.0
  %1422 = vmatpush2.msra.mxu0 0.0
  %1423 = vmatprep.subr.mxu0 0.0
  %1424 = vmatpush2.msra.mxu0 0.0
  %1425 = vmatprep.subr.mxu0 0.0
  %1426 = vmatpush2.msra.mxu0 0.0
  %1427 = vmatprep.subr.mxu0 0.0
  %1428 = vmatpush2.msra.mxu0 0.0
  %1429 = vmatprep.subr.mxu0 0.0
  %1430 = vmatpush2.msra.mxu0 0.0
  %1431 = vmatprep.subr.mxu0 0.0
  %1432 = vmatpush2.msra.mxu0 0.0
  %1433 = vmatprep.subr.mxu0 0.0
  %1434 = vmatpush2.msra.mxu0 0.0
  %1435 = vmatprep.subr.mxu0 0.0
  %1436 = vmatpush2.msra.mxu0 0.0
  %1437 = vmatprep.subr.mxu0 0.0
  %1438 = vmatpush2.msra.mxu0 0.0
  %1439 = vmatprep.subr.mxu0 0.0
  %1440 = vmatpush2.msra.mxu0 0.0
  %1441 = vmatprep.subr.mxu0 0.0
  %1442 = vmatpush2.msra.mxu0 0.0
  %1443 = vmatprep.subr.mxu0 0.0
  %1444 = vmatpush2.msra.mxu0 0.0
  %1445 = vmatprep.subr.mxu0 0.0
  %1446 = vmatpush2.msra.mxu0 0.0
  %1447 = vmatprep.mubr.f32.mxu0 0.0
  %v1448 = vand.u32 %v46, 4294901760
  %1449 = vmatmul.mubr.f32.gmra.mxu0 %v1448
  %v1450 = vpop.f32.mrf.mxu0
  %v1451 = vadd.f32 %v1235, %v1450
  %v1452 = vpop.f32.mrf.mxu0
  %1453 = vmatprep.mubr.f32.mxu0 0.0
  %v1454 = vand.u32 %v49, 4294901760
  %1455 = vmatmul.mubr.f32.gmra.mxu0 %v1454
  %v1456 = vpop.f32.mrf.mxu0
  %v1457 = vadd.f32 %v1241, %v1456
  %v1458 = vpop.f32.mrf.mxu0
  %1459 = vmatprep.mubr.f32.mxu0 0.0
  %v1460 = vand.u32 %v52, 4294901760
  %1461 = vmatmul.mubr.f32.gmra.mxu0 %v1460
  %v1462 = vpop.f32.mrf.mxu0
  %v1463 = vadd.f32 %v1247, %v1462
  %v1464 = vpop.f32.mrf.mxu0
  %1465 = vmatprep.mubr.f32.mxu0 0.0
  %v1466 = vand.u32 %v55, 4294901760
  %1467 = vmatmul.mubr.f32.gmra.mxu0 %v1466
  %v1468 = vpop.f32.mrf.mxu0
  %v1469 = vadd.f32 %v1253, %v1468
  %v1470 = vpop.f32.mrf.mxu0
  %1471 = vmatprep.mubr.f32.mxu0 0.0
  %v1472 = vand.u32 %v58, 4294901760
  %1473 = vmatmul.mubr.f32.gmra.mxu0 %v1472
  %v1474 = vpop.f32.mrf.mxu0
  %v1475 = vadd.f32 %v1259, %v1474
  %v1476 = vpop.f32.mrf.mxu0
  %1477 = vmatprep.mubr.f32.mxu0 0.0
  %v1478 = vand.u32 %v61, 4294901760
  %1479 = vmatmul.mubr.f32.gmra.mxu0 %v1478
  %v1480 = vpop.f32.mrf.mxu0
  %v1481 = vadd.f32 %v1265, %v1480
  %v1482 = vpop.f32.mrf.mxu0
  %1483 = vmatprep.mubr.f32.mxu0 0.0
  %v1484 = vand.u32 %v64, 4294901760
  %1485 = vmatmul.mubr.f32.gmra.mxu0 %v1484
  %v1486 = vpop.f32.mrf.mxu0
  %v1487 = vadd.f32 %v1271, %v1486
  %v1488 = vpop.f32.mrf.mxu0
  %1489 = vmatprep.mubr.f32.mxu0 0.0
  %v1490 = vand.u32 %v67, 4294901760
  %1491 = vmatmul.mubr.f32.gmra.mxu0 %v1490
  %v1492 = vpop.f32.mrf.mxu0
  %v1493 = vadd.f32 %v1277, %v1492
  %v1494 = vpop.f32.mrf.mxu0
  %1495 = vmatprep.mubr.f32.mxu0 0.0
  %v1496 = vand.u32 %v70, 4294901760
  %1497 = vmatmul.mubr.f32.gmra.mxu0 %v1496
  %v1498 = vpop.f32.mrf.mxu0
  %v1499 = vadd.f32 %v1283, %v1498
  %v1500 = vpop.f32.mrf.mxu0
  %1501 = vmatprep.mubr.f32.mxu0 0.0
  %v1502 = vand.u32 %v73, 4294901760
  %1503 = vmatmul.mubr.f32.gmra.mxu0 %v1502
  %v1504 = vpop.f32.mrf.mxu0
  %v1505 = vadd.f32 %v1289, %v1504
  %v1506 = vpop.f32.mrf.mxu0
  %1507 = vmatprep.mubr.f32.mxu0 0.0
  %v1508 = vand.u32 %v76, 4294901760
  %1509 = vmatmul.mubr.f32.gmra.mxu0 %v1508
  %v1510 = vpop.f32.mrf.mxu0
  %v1511 = vadd.f32 %v1295, %v1510
  %v1512 = vpop.f32.mrf.mxu0
  %1513 = vmatprep.mubr.f32.mxu0 0.0
  %v1514 = vand.u32 %v79, 4294901760
  %1515 = vmatmul.mubr.f32.gmra.mxu0 %v1514
  %v1516 = vpop.f32.mrf.mxu0
  %v1517 = vadd.f32 %v1301, %v1516
  %v1518 = vpop.f32.mrf.mxu0
  %1519 = vmatprep.mubr.f32.mxu0 0.0
  %v1520 = vand.u32 %v82, 4294901760
  %1521 = vmatmul.mubr.f32.gmra.mxu0 %v1520
  %v1522 = vpop.f32.mrf.mxu0
  %v1523 = vadd.f32 %v1307, %v1522
  %v1524 = vpop.f32.mrf.mxu0
  %1525 = vmatprep.mubr.f32.mxu0 0.0
  %v1526 = vand.u32 %v85, 4294901760
  %1527 = vmatmul.mubr.f32.gmra.mxu0 %v1526
  %v1528 = vpop.f32.mrf.mxu0
  %v1529 = vadd.f32 %v1313, %v1528
  %v1530 = vpop.f32.mrf.mxu0
  %1531 = vmatprep.mubr.f32.mxu0 0.0
  %v1532 = vand.u32 %v88, 4294901760
  %1533 = vmatmul.mubr.f32.gmra.mxu0 %v1532
  %v1534 = vpop.f32.mrf.mxu0
  %v1535 = vadd.f32 %v1319, %v1534
  %v1536 = vpop.f32.mrf.mxu0
  %1537 = vmatprep.mubr.f32.mxu0 0.0
  %v1538 = vand.u32 %v91, 4294901760
  %1539 = vmatmul.mubr.f32.gmra.mxu0 %v1538
  %v1540 = vpop.f32.mrf.mxu0
  %v1541 = vadd.f32 %v1325, %v1540
  %v1542 = vpop.f32.mrf.mxu0
  %1543 = vmatprep.mubr.f32.mxu0 0.0
  %v1544 = vand.u32 %v94, 4294901760
  %1545 = vmatmul.mubr.f32.gmra.mxu0 %v1544
  %v1546 = vpop.f32.mrf.mxu0
  %v1547 = vadd.f32 %v1331, %v1546
  %v1548 = vpop.f32.mrf.mxu0
  %1549 = vmatprep.mubr.f32.mxu0 0.0
  %v1550 = vand.u32 %v97, 4294901760
  %1551 = vmatmul.mubr.f32.gmra.mxu0 %v1550
  %v1552 = vpop.f32.mrf.mxu0
  %v1553 = vadd.f32 %v1337, %v1552
  %v1554 = vpop.f32.mrf.mxu0
  %1555 = vmatprep.mubr.f32.mxu0 0.0
  %v1556 = vand.u32 %v100, 4294901760
  %1557 = vmatmul.mubr.f32.gmra.mxu0 %v1556
  %v1558 = vpop.f32.mrf.mxu0
  %v1559 = vadd.f32 %v1343, %v1558
  %v1560 = vpop.f32.mrf.mxu0
  %1561 = vmatprep.mubr.f32.mxu0 0.0
  %v1562 = vand.u32 %v103, 4294901760
  %1563 = vmatmul.mubr.f32.gmra.mxu0 %v1562
  %v1564 = vpop.f32.mrf.mxu0
  %v1565 = vadd.f32 %v1349, %v1564
  %v1566 = vpop.f32.mrf.mxu0
  %1567 = vmatprep.mubr.f32.mxu0 0.0
  %v1568 = vand.u32 %v106, 4294901760
  %1569 = vmatmul.mubr.f32.gmra.mxu0 %v1568
  %v1570 = vpop.f32.mrf.mxu0
  %v1571 = vadd.f32 %v1355, %v1570
  %v1572 = vpop.f32.mrf.mxu0
  %1573 = vmatprep.mubr.f32.mxu0 0.0
  %v1574 = vand.u32 %v109, 4294901760
  %1575 = vmatmul.mubr.f32.gmra.mxu0 %v1574
  %v1576 = vpop.f32.mrf.mxu0
  %v1577 = vadd.f32 %v1361, %v1576
  %v1578 = vpop.f32.mrf.mxu0
  %1579 = vmatprep.mubr.f32.mxu0 0.0
  %v1580 = vand.u32 %v112, 4294901760
  %1581 = vmatmul.mubr.f32.gmra.mxu0 %v1580
  %v1582 = vpop.f32.mrf.mxu0
  %v1583 = vadd.f32 %v1367, %v1582
  %v1584 = vpop.f32.mrf.mxu0
  %1585 = vmatprep.mubr.f32.mxu0 0.0
  %v1586 = vand.u32 %v115, 4294901760
  %1587 = vmatmul.mubr.f32.gmra.mxu0 %v1586
  %v1588 = vpop.f32.mrf.mxu0
  %v1589 = vadd.f32 %v1373, %v1588
  %v1590 = vpop.f32.mrf.mxu0
  %1591 = vmatprep.mubr.f32.mxu0 0.0
  %v1592 = vand.u32 %v118, 4294901760
  %1593 = vmatmul.mubr.f32.gmra.mxu0 %v1592
  %v1594 = vpop.f32.mrf.mxu0
  %v1595 = vadd.f32 %v1379, %v1594
  %v1596 = vpop.f32.mrf.mxu0
  %1597 = vdwg.mxu0
  %v1598 = vmax.f32 %v1451, 0.0
  %v1599 = vmax.f32 %v1457, 0.0
  %v1600 = vmax.f32 %v1463, 0.0
  %v1601 = vmax.f32 %v1469, 0.0
  %v1602 = vmax.f32 %v1475, 0.0
  %v1603 = vmax.f32 %v1481, 0.0
  %v1604 = vmax.f32 %v1487, 0.0
  %v1605 = vmax.f32 %v1493, 0.0
  %v1606 = vmax.f32 %v1499, 0.0
  %v1607 = vmax.f32 %v1505, 0.0
  %v1608 = vmax.f32 %v1511, 0.0
  %v1609 = vmax.f32 %v1517, 0.0
  %v1610 = vmax.f32 %v1523, 0.0
  %v1611 = vmax.f32 %v1529, 0.0
  %v1612 = vmax.f32 %v1535, 0.0
  %v1613 = vmax.f32 %v1541, 0.0
  %v1614 = vmax.f32 %v1547, 0.0
  %v1615 = vmax.f32 %v1553, 0.0
  %v1616 = vmax.f32 %v1559, 0.0
  %v1617 = vmax.f32 %v1565, 0.0
  %v1618 = vmax.f32 %v1571, 0.0
  %v1619 = vmax.f32 %v1577, 0.0
  %v1620 = vmax.f32 %v1583, 0.0
  %v1621 = vmax.f32 %v1589, 0.0
  %v1622 = vmax.f32 %v1595, 0.0
  %v1623 = vld [vmem:[%s2] sm:$0x3]
  %s1624 = sld [smem:[#allocation2]]
  %v1625 = vstv %s1624
  %v1627 = vlaneseq
  %v1628 = vshrl.u32 %v1627, 7
  %v1629 = vsub.s32 0, %v1628
  %v1630 = vrot.slane %v1623, %v1629
  %v1631 = vlaneseq
  %v1632 = vshrl.u32 %v1631, 7
  %v1633 = vsub.s32 1, %v1632
  %v1634 = vrot.slane %v1623, %v1633
  %vm1636 = vcmask 588800
  %v1637 = vsel %vm1636, %v1634, 0
  %1639 = vmatprep.subr.mxu0 0.0
  %v1640 = vand.u32 %v1613, 4294901760
  %1641 = vmatpush1.msra.mxu0 %v1640
  %1642 = vmatprep.subr.mxu0 0.0
  %v1643 = vand.u32 %v1612, 4294901760
  %1644 = vmatpush1.msra.mxu0 %v1643
  %1645 = vmatprep.subr.mxu0 0.0
  %v1646 = vand.u32 %v1611, 4294901760
  %1647 = vmatpush1.msra.mxu0 %v1646
  %1648 = vmatprep.subr.mxu0 0.0
  %v1649 = vand.u32 %v1610, 4294901760
  %1650 = vmatpush1.msra.mxu0 %v1649
  %1651 = vmatprep.subr.mxu0 0.0
  %v1652 = vand.u32 %v1609, 4294901760
  %1653 = vmatpush1.msra.mxu0 %v1652
  %1654 = vmatprep.subr.mxu0 0.0
  %v1655 = vand.u32 %v1608, 4294901760
  %1656 = vmatpush1.msra.mxu0 %v1655
  %1657 = vmatprep.subr.mxu0 0.0
  %v1658 = vand.u32 %v1607, 4294901760
  %1659 = vmatpush1.msra.mxu0 %v1658
  %1660 = vmatprep.subr.mxu0 0.0
  %v1661 = vand.u32 %v1606, 4294901760
  %1662 = vmatpush1.msra.mxu0 %v1661
  %1663 = vmatprep.subr.mxu0 0.0
  %v1664 = vand.u32 %v1605, 4294901760
  %1665 = vmatpush1.msra.mxu0 %v1664
  %1666 = vmatprep.subr.mxu0 0.0
  %v1667 = vand.u32 %v1604, 4294901760
  %1668 = vmatpush1.msra.mxu0 %v1667
  %1669 = vmatprep.subr.mxu0 0.0
  %v1670 = vand.u32 %v1603, 4294901760
  %1671 = vmatpush1.msra.mxu0 %v1670
  %1672 = vmatprep.subr.mxu0 0.0
  %v1673 = vand.u32 %v1602, 4294901760
  %1674 = vmatpush1.msra.mxu0 %v1673
  %1675 = vmatprep.subr.mxu0 0.0
  %v1676 = vand.u32 %v1601, 4294901760
  %1677 = vmatpush1.msra.mxu0 %v1676
  %1678 = vmatprep.subr.mxu0 0.0
  %v1679 = vand.u32 %v1600, 4294901760
  %1680 = vmatpush1.msra.mxu0 %v1679
  %1681 = vmatprep.subr.mxu0 0.0
  %v1682 = vand.u32 %v1599, 4294901760
  %1683 = vmatpush1.msra.mxu0 %v1682
  %1684 = vmatprep.subr.mxu0 0.0
  %v1685 = vand.u32 %v1598, 4294901760
  %1686 = vmatpush1.msra.mxu0 %v1685
  %1687 = vmatprep.subr.mxu0 0.0
  %1688 = vmatpush2.msra.mxu0 0.0
  %1689 = vmatprep.subr.mxu0 0.0
  %1690 = vmatpush2.msra.mxu0 0.0
  %1691 = vmatprep.subr.mxu0 0.0
  %1692 = vmatpush2.msra.mxu0 0.0
  %1693 = vmatprep.subr.mxu0 0.0
  %1694 = vmatpush2.msra.mxu0 0.0
  %1695 = vmatprep.subr.mxu0 0.0
  %1696 = vmatpush2.msra.mxu0 0.0
  %1697 = vmatprep.subr.mxu0 0.0
  %1698 = vmatpush2.msra.mxu0 0.0
  %1699 = vmatprep.subr.mxu0 0.0
  %1700 = vmatpush2.msra.mxu0 0.0
  %1701 = vmatprep.subr.mxu0 0.0
  %v1702 = vand.u32 %v1622, 4294901760
  %1703 = vmatpush2.msra.mxu0 %v1702
  %1704 = vmatprep.subr.mxu0 0.0
  %v1705 = vand.u32 %v1621, 4294901760
  %1706 = vmatpush2.msra.mxu0 %v1705
  %1707 = vmatprep.subr.mxu0 0.0
  %v1708 = vand.u32 %v1620, 4294901760
  %1709 = vmatpush2.msra.mxu0 %v1708
  %1710 = vmatprep.subr.mxu0 0.0
  %v1711 = vand.u32 %v1619, 4294901760
  %1712 = vmatpush2.msra.mxu0 %v1711
  %1713 = vmatprep.subr.mxu0 0.0
  %v1714 = vand.u32 %v1618, 4294901760
  %1715 = vmatpush2.msra.mxu0 %v1714
  %1716 = vmatprep.subr.mxu0 0.0
  %v1717 = vand.u32 %v1617, 4294901760
  %1718 = vmatpush2.msra.mxu0 %v1717
  %1719 = vmatprep.subr.mxu0 0.0
  %v1720 = vand.u32 %v1616, 4294901760
  %1721 = vmatpush2.msra.mxu0 %v1720
  %1722 = vmatprep.subr.mxu0 0.0
  %v1723 = vand.u32 %v1615, 4294901760
  %1724 = vmatpush2.msra.mxu0 %v1723
  %1725 = vmatprep.subr.mxu0 0.0
  %v1726 = vand.u32 %v1614, 4294901760
  %1727 = vmatpush2.msra.mxu0 %v1726
  %v1728 = vand.u32 %v1637, 4294901760
  %v1729 = vsub.f32 %v1637, %v1728
  %v1730 = vand.u32 %v1729, 4294901760
  %v1731 = vsub.f32 %v1729, %v1730
  %v1732 = vand.u32 %v1731, 4294901760
  %1733 = vmatprep.mubr.f32.mxu0 %v1732
  %v1734 = vand.u32 %v1630, 4294901760
  %v1735 = vsub.f32 %v1630, %v1734
  %v1736 = vand.u32 %v1735, 4294901760
  %v1737 = vsub.f32 %v1735, %v1736
  %v1738 = vand.u32 %v1737, 4294901760
  %1739 = vmatmul.mubr.f32.gmra.mxu0 %v1738
  %v1740 = vpop.f32.mrf.mxu0
  %v1741 = vadd.f32 %v1625, %v1740
  %v1742 = vpop.f32.mrf.mxu0
  %1743 = vdwg.mxu0
  %1744 = vmatprep.subr.mxu0 0.0
  %v1745 = vand.u32 %v1613, 4294901760
  %v1746 = vsub.f32 %v1613, %v1745
  %v1747 = vand.u32 %v1746, 4294901760
  %v1748 = vsub.f32 %v1746, %v1747
  %v1749 = vand.u32 %v1748, 4294901760
  %1750 = vmatpush1.msra.mxu0 %v1749
  %1751 = vmatprep.subr.mxu0 0.0
  %v1752 = vand.u32 %v1612, 4294901760
  %v1753 = vsub.f32 %v1612, %v1752
  %v1754 = vand.u32 %v1753, 4294901760
  %v1755 = vsub.f32 %v1753, %v1754
  %v1756 = vand.u32 %v1755, 4294901760
  %1757 = vmatpush1.msra.mxu0 %v1756
  %1758 = vmatprep.subr.mxu0 0.0
  %v1759 = vand.u32 %v1611, 4294901760
  %v1760 = vsub.f32 %v1611, %v1759
  %v1761 = vand.u32 %v1760, 4294901760
  %v1762 = vsub.f32 %v1760, %v1761
  %v1763 = vand.u32 %v1762, 4294901760
  %1764 = vmatpush1.msra.mxu0 %v1763
  %1765 = vmatprep.subr.mxu0 0.0
  %v1766 = vand.u32 %v1610, 4294901760
  %v1767 = vsub.f32 %v1610, %v1766
  %v1768 = vand.u32 %v1767, 4294901760
  %v1769 = vsub.f32 %v1767, %v1768
  %v1770 = vand.u32 %v1769, 4294901760
  %1771 = vmatpush1.msra.mxu0 %v1770
  %1772 = vmatprep.subr.mxu0 0.0
  %v1773 = vand.u32 %v1609, 4294901760
  %v1774 = vsub.f32 %v1609, %v1773
  %v1775 = vand.u32 %v1774, 4294901760
  %v1776 = vsub.f32 %v1774, %v1775
  %v1777 = vand.u32 %v1776, 4294901760
  %1778 = vmatpush1.msra.mxu0 %v1777
  %1779 = vmatprep.subr.mxu0 0.0
  %v1780 = vand.u32 %v1608, 4294901760
  %v1781 = vsub.f32 %v1608, %v1780
  %v1782 = vand.u32 %v1781, 4294901760
  %v1783 = vsub.f32 %v1781, %v1782
  %v1784 = vand.u32 %v1783, 4294901760
  %1785 = vmatpush1.msra.mxu0 %v1784
  %1786 = vmatprep.subr.mxu0 0.0
  %v1787 = vand.u32 %v1607, 4294901760
  %v1788 = vsub.f32 %v1607, %v1787
  %v1789 = vand.u32 %v1788, 4294901760
  %v1790 = vsub.f32 %v1788, %v1789
  %v1791 = vand.u32 %v1790, 4294901760
  %1792 = vmatpush1.msra.mxu0 %v1791
  %1793 = vmatprep.subr.mxu0 0.0
  %v1794 = vand.u32 %v1606, 4294901760
  %v1795 = vsub.f32 %v1606, %v1794
  %v1796 = vand.u32 %v1795, 4294901760
  %v1797 = vsub.f32 %v1795, %v1796
  %v1798 = vand.u32 %v1797, 4294901760
  %1799 = vmatpush1.msra.mxu0 %v1798
  %1800 = vmatprep.subr.mxu0 0.0
  %v1801 = vand.u32 %v1605, 4294901760
  %v1802 = vsub.f32 %v1605, %v1801
  %v1803 = vand.u32 %v1802, 4294901760
  %v1804 = vsub.f32 %v1802, %v1803
  %v1805 = vand.u32 %v1804, 4294901760
  %1806 = vmatpush1.msra.mxu0 %v1805
  %1807 = vmatprep.subr.mxu0 0.0
  %v1808 = vand.u32 %v1604, 4294901760
  %v1809 = vsub.f32 %v1604, %v1808
  %v1810 = vand.u32 %v1809, 4294901760
  %v1811 = vsub.f32 %v1809, %v1810
  %v1812 = vand.u32 %v1811, 4294901760
  %1813 = vmatpush1.msra.mxu0 %v1812
  %1814 = vmatprep.subr.mxu0 0.0
  %v1815 = vand.u32 %v1603, 4294901760
  %v1816 = vsub.f32 %v1603, %v1815
  %v1817 = vand.u32 %v1816, 4294901760
  %v1818 = vsub.f32 %v1816, %v1817
  %v1819 = vand.u32 %v1818, 4294901760
  %1820 = vmatpush1.msra.mxu0 %v1819
  %1821 = vmatprep.subr.mxu0 0.0
  %v1822 = vand.u32 %v1602, 4294901760
  %v1823 = vsub.f32 %v1602, %v1822
  %v1824 = vand.u32 %v1823, 4294901760
  %v1825 = vsub.f32 %v1823, %v1824
  %v1826 = vand.u32 %v1825, 4294901760
  %1827 = vmatpush1.msra.mxu0 %v1826
  %1828 = vmatprep.subr.mxu0 0.0
  %v1829 = vand.u32 %v1601, 4294901760
  %v1830 = vsub.f32 %v1601, %v1829
  %v1831 = vand.u32 %v1830, 4294901760
  %v1832 = vsub.f32 %v1830, %v1831
  %v1833 = vand.u32 %v1832, 4294901760
  %1834 = vmatpush1.msra.mxu0 %v1833
  %1835 = vmatprep.subr.mxu0 0.0
  %v1836 = vand.u32 %v1600, 4294901760
  %v1837 = vsub.f32 %v1600, %v1836
  %v1838 = vand.u32 %v1837, 4294901760
  %v1839 = vsub.f32 %v1837, %v1838
  %v1840 = vand.u32 %v1839, 4294901760
  %1841 = vmatpush1.msra.mxu0 %v1840
  %1842 = vmatprep.subr.mxu0 0.0
  %v1843 = vand.u32 %v1599, 4294901760
  %v1844 = vsub.f32 %v1599, %v1843
  %v1845 = vand.u32 %v1844, 4294901760
  %v1846 = vsub.f32 %v1844, %v1845
  %v1847 = vand.u32 %v1846, 4294901760
  %1848 = vmatpush1.msra.mxu0 %v1847
  %1849 = vmatprep.subr.mxu0 0.0
  %v1850 = vand.u32 %v1598, 4294901760
  %v1851 = vsub.f32 %v1598, %v1850
  %v1852 = vand.u32 %v1851, 4294901760
  %v1853 = vsub.f32 %v1851, %v1852
  %v1854 = vand.u32 %v1853, 4294901760
  %1855 = vmatpush1.msra.mxu0 %v1854
  %1856 = vmatprep.subr.mxu0 0.0
  %1857 = vmatpush2.msra.mxu0 0.0
  %1858 = vmatprep.subr.mxu0 0.0
  %1859 = vmatpush2.msra.mxu0 0.0
  %1860 = vmatprep.subr.mxu0 0.0
  %1861 = vmatpush2.msra.mxu0 0.0
  %1862 = vmatprep.subr.mxu0 0.0
  %1863 = vmatpush2.msra.mxu0 0.0
  %1864 = vmatprep.subr.mxu0 0.0
  %1865 = vmatpush2.msra.mxu0 0.0
  %1866 = vmatprep.subr.mxu0 0.0
  %1867 = vmatpush2.msra.mxu0 0.0
  %1868 = vmatprep.subr.mxu0 0.0
  %1869 = vmatpush2.msra.mxu0 0.0
  %1870 = vmatprep.subr.mxu0 0.0
  %v1871 = vand.u32 %v1622, 4294901760
  %v1872 = vsub.f32 %v1622, %v1871
  %v1873 = vand.u32 %v1872, 4294901760
  %v1874 = vsub.f32 %v1872, %v1873
  %v1875 = vand.u32 %v1874, 4294901760
  %1876 = vmatpush2.msra.mxu0 %v1875
  %1877 = vmatprep.subr.mxu0 0.0
  %v1878 = vand.u32 %v1621, 4294901760
  %v1879 = vsub.f32 %v1621, %v1878
  %v1880 = vand.u32 %v1879, 4294901760
  %v1881 = vsub.f32 %v1879, %v1880
  %v1882 = vand.u32 %v1881, 4294901760
  %1883 = vmatpush2.msra.mxu0 %v1882
  %1884 = vmatprep.subr.mxu0 0.0
  %v1885 = vand.u32 %v1620, 4294901760
  %v1886 = vsub.f32 %v1620, %v1885
  %v1887 = vand.u32 %v1886, 4294901760
  %v1888 = vsub.f32 %v1886, %v1887
  %v1889 = vand.u32 %v1888, 4294901760
  %1890 = vmatpush2.msra.mxu0 %v1889
  %1891 = vmatprep.subr.mxu0 0.0
  %v1892 = vand.u32 %v1619, 4294901760
  %v1893 = vsub.f32 %v1619, %v1892
  %v1894 = vand.u32 %v1893, 4294901760
  %v1895 = vsub.f32 %v1893, %v1894
  %v1896 = vand.u32 %v1895, 4294901760
  %1897 = vmatpush2.msra.mxu0 %v1896
  %1898 = vmatprep.subr.mxu0 0.0
  %v1899 = vand.u32 %v1618, 4294901760
  %v1900 = vsub.f32 %v1618, %v1899
  %v1901 = vand.u32 %v1900, 4294901760
  %v1902 = vsub.f32 %v1900, %v1901
  %v1903 = vand.u32 %v1902, 4294901760
  %1904 = vmatpush2.msra.mxu0 %v1903
  %1905 = vmatprep.subr.mxu0 0.0
  %v1906 = vand.u32 %v1617, 4294901760
  %v1907 = vsub.f32 %v1617, %v1906
  %v1908 = vand.u32 %v1907, 4294901760
  %v1909 = vsub.f32 %v1907, %v1908
  %v1910 = vand.u32 %v1909, 4294901760
  %1911 = vmatpush2.msra.mxu0 %v1910
  %1912 = vmatprep.subr.mxu0 0.0
  %v1913 = vand.u32 %v1616, 4294901760
  %v1914 = vsub.f32 %v1616, %v1913
  %v1915 = vand.u32 %v1914, 4294901760
  %v1916 = vsub.f32 %v1914, %v1915
  %v1917 = vand.u32 %v1916, 4294901760
  %1918 = vmatpush2.msra.mxu0 %v1917
  %1919 = vmatprep.subr.mxu0 0.0
  %v1920 = vand.u32 %v1615, 4294901760
  %v1921 = vsub.f32 %v1615, %v1920
  %v1922 = vand.u32 %v1921, 4294901760
  %v1923 = vsub.f32 %v1921, %v1922
  %v1924 = vand.u32 %v1923, 4294901760
  %1925 = vmatpush2.msra.mxu0 %v1924
  %1926 = vmatprep.subr.mxu0 0.0
  %v1927 = vand.u32 %v1614, 4294901760
  %v1928 = vsub.f32 %v1614, %v1927
  %v1929 = vand.u32 %v1928, 4294901760
  %v1930 = vsub.f32 %v1928, %v1929
  %v1931 = vand.u32 %v1930, 4294901760
  %1932 = vmatpush2.msra.mxu0 %v1931
  %v1933 = vand.u32 %v1637, 4294901760
  %1934 = vmatprep.mubr.f32.mxu0 %v1933
  %v1935 = vand.u32 %v1630, 4294901760
  %1936 = vmatmul.mubr.f32.gmra.mxu0 %v1935
  %v1937 = vpop.f32.mrf.mxu0
  %v1938 = vadd.f32 %v1741, %v1937
  %v1939 = vpop.f32.mrf.mxu0
  %1940 = vdwg.mxu0
  %1941 = vmatprep.subr.mxu0 0.0
  %v1942 = vand.u32 %v1613, 4294901760
  %v1943 = vsub.f32 %v1613, %v1942
  %1944 = vmatpush1.msra.mxu0 %v1943
  %1945 = vmatprep.subr.mxu0 0.0
  %v1946 = vand.u32 %v1612, 4294901760
  %v1947 = vsub.f32 %v1612, %v1946
  %1948 = vmatpush1.msra.mxu0 %v1947
  %1949 = vmatprep.subr.mxu0 0.0
  %v1950 = vand.u32 %v1611, 4294901760
  %v1951 = vsub.f32 %v1611, %v1950
  %1952 = vmatpush1.msra.mxu0 %v1951
  %1953 = vmatprep.subr.mxu0 0.0
  %v1954 = vand.u32 %v1610, 4294901760
  %v1955 = vsub.f32 %v1610, %v1954
  %1956 = vmatpush1.msra.mxu0 %v1955
  %1957 = vmatprep.subr.mxu0 0.0
  %v1958 = vand.u32 %v1609, 4294901760
  %v1959 = vsub.f32 %v1609, %v1958
  %1960 = vmatpush1.msra.mxu0 %v1959
  %1961 = vmatprep.subr.mxu0 0.0
  %v1962 = vand.u32 %v1608, 4294901760
  %v1963 = vsub.f32 %v1608, %v1962
  %1964 = vmatpush1.msra.mxu0 %v1963
  %1965 = vmatprep.subr.mxu0 0.0
  %v1966 = vand.u32 %v1607, 4294901760
  %v1967 = vsub.f32 %v1607, %v1966
  %1968 = vmatpush1.msra.mxu0 %v1967
  %1969 = vmatprep.subr.mxu0 0.0
  %v1970 = vand.u32 %v1606, 4294901760
  %v1971 = vsub.f32 %v1606, %v1970
  %1972 = vmatpush1.msra.mxu0 %v1971
  %1973 = vmatprep.subr.mxu0 0.0
  %v1974 = vand.u32 %v1605, 4294901760
  %v1975 = vsub.f32 %v1605, %v1974
  %1976 = vmatpush1.msra.mxu0 %v1975
  %1977 = vmatprep.subr.mxu0 0.0
  %v1978 = vand.u32 %v1604, 4294901760
  %v1979 = vsub.f32 %v1604, %v1978
  %1980 = vmatpush1.msra.mxu0 %v1979
  %1981 = vmatprep.subr.mxu0 0.0
  %v1982 = vand.u32 %v1603, 4294901760
  %v1983 = vsub.f32 %v1603, %v1982
  %1984 = vmatpush1.msra.mxu0 %v1983
  %1985 = vmatprep.subr.mxu0 0.0
  %v1986 = vand.u32 %v1602, 4294901760
  %v1987 = vsub.f32 %v1602, %v1986
  %1988 = vmatpush1.msra.mxu0 %v1987
  %1989 = vmatprep.subr.mxu0 0.0
  %v1990 = vand.u32 %v1601, 4294901760
  %v1991 = vsub.f32 %v1601, %v1990
  %1992 = vmatpush1.msra.mxu0 %v1991
  %1993 = vmatprep.subr.mxu0 0.0
  %v1994 = vand.u32 %v1600, 4294901760
  %v1995 = vsub.f32 %v1600, %v1994
  %1996 = vmatpush1.msra.mxu0 %v1995
  %1997 = vmatprep.subr.mxu0 0.0
  %v1998 = vand.u32 %v1599, 4294901760
  %v1999 = vsub.f32 %v1599, %v1998
  %2000 = vmatpush1.msra.mxu0 %v1999
  %2001 = vmatprep.subr.mxu0 0.0
  %v2002 = vand.u32 %v1598, 4294901760
  %v2003 = vsub.f32 %v1598, %v2002
  %2004 = vmatpush1.msra.mxu0 %v2003
  %2005 = vmatprep.subr.mxu0 0.0
  %2006 = vmatpush2.msra.mxu0 0.0
  %2007 = vmatprep.subr.mxu0 0.0
  %2008 = vmatpush2.msra.mxu0 0.0
  %2009 = vmatprep.subr.mxu0 0.0
  %2010 = vmatpush2.msra.mxu0 0.0
  %2011 = vmatprep.subr.mxu0 0.0
  %2012 = vmatpush2.msra.mxu0 0.0
  %2013 = vmatprep.subr.mxu0 0.0
  %2014 = vmatpush2.msra.mxu0 0.0
  %2015 = vmatprep.subr.mxu0 0.0
  %2016 = vmatpush2.msra.mxu0 0.0
  %2017 = vmatprep.subr.mxu0 0.0
  %2018 = vmatpush2.msra.mxu0 0.0
  %2019 = vmatprep.subr.mxu0 0.0
  %v2020 = vand.u32 %v1622, 4294901760
  %v2021 = vsub.f32 %v1622, %v2020
  %2022 = vmatpush2.msra.mxu0 %v2021
  %2023 = vmatprep.subr.mxu0 0.0
  %v2024 = vand.u32 %v1621, 4294901760
  %v2025 = vsub.f32 %v1621, %v2024
  %2026 = vmatpush2.msra.mxu0 %v2025
  %2027 = vmatprep.subr.mxu0 0.0
  %v2028 = vand.u32 %v1620, 4294901760
  %v2029 = vsub.f32 %v1620, %v2028
  %2030 = vmatpush2.msra.mxu0 %v2029
  %2031 = vmatprep.subr.mxu0 0.0
  %v2032 = vand.u32 %v1619, 4294901760
  %v2033 = vsub.f32 %v1619, %v2032
  %2034 = vmatpush2.msra.mxu0 %v2033
  %2035 = vmatprep.subr.mxu0 0.0
  %v2036 = vand.u32 %v1618, 4294901760
  %v2037 = vsub.f32 %v1618, %v2036
  %2038 = vmatpush2.msra.mxu0 %v2037
  %2039 = vmatprep.subr.mxu0 0.0
  %v2040 = vand.u32 %v1617, 4294901760
  %v2041 = vsub.f32 %v1617, %v2040
  %2042 = vmatpush2.msra.mxu0 %v2041
  %2043 = vmatprep.subr.mxu0 0.0
  %v2044 = vand.u32 %v1616, 4294901760
  %v2045 = vsub.f32 %v1616, %v2044
  %2046 = vmatpush2.msra.mxu0 %v2045
  %2047 = vmatprep.subr.mxu0 0.0
  %v2048 = vand.u32 %v1615, 4294901760
  %v2049 = vsub.f32 %v1615, %v2048
  %2050 = vmatpush2.msra.mxu0 %v2049
  %2051 = vmatprep.subr.mxu0 0.0
  %v2052 = vand.u32 %v1614, 4294901760
  %v2053 = vsub.f32 %v1614, %v2052
  %2054 = vmatpush2.msra.mxu0 %v2053
  %v2055 = vand.u32 %v1637, 4294901760
  %v2056 = vsub.f32 %v1637, %v2055
  %2057 = vmatprep.mubr.f32.mxu0 %v2056
  %v2058 = vand.u32 %v1630, 4294901760
  %v2059 = vsub.f32 %v1630, %v2058
  %2060 = vmatmul.mubr.f32.gmra.mxu0 %v2059
  %v2061 = vpop.f32.mrf.mxu0
  %v2062 = vadd.f32 %v1938, %v2061
  %v2063 = vpop.f32.mrf.mxu0
  %2064 = vdwg.mxu0
  %2065 = vmatprep.subr.mxu0 0.0
  %v2066 = vand.u32 %v1613, 4294901760
  %2067 = vmatpush1.msra.mxu0 %v2066
  %2068 = vmatprep.subr.mxu0 0.0
  %v2069 = vand.u32 %v1612, 4294901760
  %2070 = vmatpush1.msra.mxu0 %v2069
  %2071 = vmatprep.subr.mxu0 0.0
  %v2072 = vand.u32 %v1611, 4294901760
  %2073 = vmatpush1.msra.mxu0 %v2072
  %2074 = vmatprep.subr.mxu0 0.0
  %v2075 = vand.u32 %v1610, 4294901760
  %2076 = vmatpush1.msra.mxu0 %v2075
  %2077 = vmatprep.subr.mxu0 0.0
  %v2078 = vand.u32 %v1609, 4294901760
  %2079 = vmatpush1.msra.mxu0 %v2078
  %2080 = vmatprep.subr.mxu0 0.0
  %v2081 = vand.u32 %v1608, 4294901760
  %2082 = vmatpush1.msra.mxu0 %v2081
  %2083 = vmatprep.subr.mxu0 0.0
  %v2084 = vand.u32 %v1607, 4294901760
  %2085 = vmatpush1.msra.mxu0 %v2084
  %2086 = vmatprep.subr.mxu0 0.0
  %v2087 = vand.u32 %v1606, 4294901760
  %2088 = vmatpush1.msra.mxu0 %v2087
  %2089 = vmatprep.subr.mxu0 0.0
  %v2090 = vand.u32 %v1605, 4294901760
  %2091 = vmatpush1.msra.mxu0 %v2090
  %2092 = vmatprep.subr.mxu0 0.0
  %v2093 = vand.u32 %v1604, 4294901760
  %2094 = vmatpush1.msra.mxu0 %v2093
  %2095 = vmatprep.subr.mxu0 0.0
  %v2096 = vand.u32 %v1603, 4294901760
  %2097 = vmatpush1.msra.mxu0 %v2096
  %2098 = vmatprep.subr.mxu0 0.0
  %v2099 = vand.u32 %v1602, 4294901760
  %2100 = vmatpush1.msra.mxu0 %v2099
  %2101 = vmatprep.subr.mxu0 0.0
  %v2102 = vand.u32 %v1601, 4294901760
  %2103 = vmatpush1.msra.mxu0 %v2102
  %2104 = vmatprep.subr.mxu0 0.0
  %v2105 = vand.u32 %v1600, 4294901760
  %2106 = vmatpush1.msra.mxu0 %v2105
  %2107 = vmatprep.subr.mxu0 0.0
  %v2108 = vand.u32 %v1599, 4294901760
  %2109 = vmatpush1.msra.mxu0 %v2108
  %2110 = vmatprep.subr.mxu0 0.0
  %v2111 = vand.u32 %v1598, 4294901760
  %2112 = vmatpush1.msra.mxu0 %v2111
  %2113 = vmatprep.subr.mxu0 0.0
  %2114 = vmatpush2.msra.mxu0 0.0
  %2115 = vmatprep.subr.mxu0 0.0
  %2116 = vmatpush2.msra.mxu0 0.0
  %2117 = vmatprep.subr.mxu0 0.0
  %2118 = vmatpush2.msra.mxu0 0.0
  %2119 = vmatprep.subr.mxu0 0.0
  %2120 = vmatpush2.msra.mxu0 0.0
  %2121 = vmatprep.subr.mxu0 0.0
  %2122 = vmatpush2.msra.mxu0 0.0
  %2123 = vmatprep.subr.mxu0 0.0
  %2124 = vmatpush2.msra.mxu0 0.0
  %2125 = vmatprep.subr.mxu0 0.0
  %2126 = vmatpush2.msra.mxu0 0.0
  %2127 = vmatprep.subr.mxu0 0.0
  %v2128 = vand.u32 %v1622, 4294901760
  %2129 = vmatpush2.msra.mxu0 %v2128
  %2130 = vmatprep.subr.mxu0 0.0
  %v2131 = vand.u32 %v1621, 4294901760
  %2132 = vmatpush2.msra.mxu0 %v2131
  %2133 = vmatprep.subr.mxu0 0.0
  %v2134 = vand.u32 %v1620, 4294901760
  %2135 = vmatpush2.msra.mxu0 %v2134
  %2136 = vmatprep.subr.mxu0 0.0
  %v2137 = vand.u32 %v1619, 4294901760
  %2138 = vmatpush2.msra.mxu0 %v2137
  %2139 = vmatprep.subr.mxu0 0.0
  %v2140 = vand.u32 %v1618, 4294901760
  %2141 = vmatpush2.msra.mxu0 %v2140
  %2142 = vmatprep.subr.mxu0 0.0
  %v2143 = vand.u32 %v1617, 4294901760
  %2144 = vmatpush2.msra.mxu0 %v2143
  %2145 = vmatprep.subr.mxu0 0.0
  %v2146 = vand.u32 %v1616, 4294901760
  %2147 = vmatpush2.msra.mxu0 %v2146
  %2148 = vmatprep.subr.mxu0 0.0
  %v2149 = vand.u32 %v1615, 4294901760
  %2150 = vmatpush2.msra.mxu0 %v2149
  %2151 = vmatprep.subr.mxu0 0.0
  %v2152 = vand.u32 %v1614, 4294901760
  %2153 = vmatpush2.msra.mxu0 %v2152
  %v2154 = vand.u32 %v1637, 4294901760
  %v2155 = vsub.f32 %v1637, %v2154
  %v2156 = vand.u32 %v2155, 4294901760
  %2157 = vmatprep.mubr.f32.mxu0 %v2156
  %v2158 = vand.u32 %v1630, 4294901760
  %v2159 = vsub.f32 %v1630, %v2158
  %v2160 = vand.u32 %v2159, 4294901760
  %2161 = vmatmul.mubr.f32.gmra.mxu0 %v2160
  %v2162 = vpop.f32.mrf.mxu0
  %v2163 = vadd.f32 %v2062, %v2162
  %v2164 = vpop.f32.mrf.mxu0
  %2165 = vdwg.mxu0
  %2166 = vmatprep.subr.mxu0 0.0
  %v2167 = vand.u32 %v1613, 4294901760
  %v2168 = vsub.f32 %v1613, %v2167
  %v2169 = vand.u32 %v2168, 4294901760
  %2170 = vmatpush1.msra.mxu0 %v2169
  %2171 = vmatprep.subr.mxu0 0.0
  %v2172 = vand.u32 %v1612, 4294901760
  %v2173 = vsub.f32 %v1612, %v2172
  %v2174 = vand.u32 %v2173, 4294901760
  %2175 = vmatpush1.msra.mxu0 %v2174
  %2176 = vmatprep.subr.mxu0 0.0
  %v2177 = vand.u32 %v1611, 4294901760
  %v2178 = vsub.f32 %v1611, %v2177
  %v2179 = vand.u32 %v2178, 4294901760
  %2180 = vmatpush1.msra.mxu0 %v2179
  %2181 = vmatprep.subr.mxu0 0.0
  %v2182 = vand.u32 %v1610, 4294901760
  %v2183 = vsub.f32 %v1610, %v2182
  %v2184 = vand.u32 %v2183, 4294901760
  %2185 = vmatpush1.msra.mxu0 %v2184
  %2186 = vmatprep.subr.mxu0 0.0
  %v2187 = vand.u32 %v1609, 4294901760
  %v2188 = vsub.f32 %v1609, %v2187
  %v2189 = vand.u32 %v2188, 4294901760
  %2190 = vmatpush1.msra.mxu0 %v2189
  %2191 = vmatprep.subr.mxu0 0.0
  %v2192 = vand.u32 %v1608, 4294901760
  %v2193 = vsub.f32 %v1608, %v2192
  %v2194 = vand.u32 %v2193, 4294901760
  %2195 = vmatpush1.msra.mxu0 %v2194
  %2196 = vmatprep.subr.mxu0 0.0
  %v2197 = vand.u32 %v1607, 4294901760
  %v2198 = vsub.f32 %v1607, %v2197
  %v2199 = vand.u32 %v2198, 4294901760
  %2200 = vmatpush1.msra.mxu0 %v2199
  %2201 = vmatprep.subr.mxu0 0.0
  %v2202 = vand.u32 %v1606, 4294901760
  %v2203 = vsub.f32 %v1606, %v2202
  %v2204 = vand.u32 %v2203, 4294901760
  %2205 = vmatpush1.msra.mxu0 %v2204
  %2206 = vmatprep.subr.mxu0 0.0
  %v2207 = vand.u32 %v1605, 4294901760
  %v2208 = vsub.f32 %v1605, %v2207
  %v2209 = vand.u32 %v2208, 4294901760
  %2210 = vmatpush1.msra.mxu0 %v2209
  %2211 = vmatprep.subr.mxu0 0.0
  %v2212 = vand.u32 %v1604, 4294901760
  %v2213 = vsub.f32 %v1604, %v2212
  %v2214 = vand.u32 %v2213, 4294901760
  %2215 = vmatpush1.msra.mxu0 %v2214
  %2216 = vmatprep.subr.mxu0 0.0
  %v2217 = vand.u32 %v1603, 4294901760
  %v2218 = vsub.f32 %v1603, %v2217
  %v2219 = vand.u32 %v2218, 4294901760
  %2220 = vmatpush1.msra.mxu0 %v2219
  %2221 = vmatprep.subr.mxu0 0.0
  %v2222 = vand.u32 %v1602, 4294901760
  %v2223 = vsub.f32 %v1602, %v2222
  %v2224 = vand.u32 %v2223, 4294901760
  %2225 = vmatpush1.msra.mxu0 %v2224
  %2226 = vmatprep.subr.mxu0 0.0
  %v2227 = vand.u32 %v1601, 4294901760
  %v2228 = vsub.f32 %v1601, %v2227
  %v2229 = vand.u32 %v2228, 4294901760
  %2230 = vmatpush1.msra.mxu0 %v2229
  %2231 = vmatprep.subr.mxu0 0.0
  %v2232 = vand.u32 %v1600, 4294901760
  %v2233 = vsub.f32 %v1600, %v2232
  %v2234 = vand.u32 %v2233, 4294901760
  %2235 = vmatpush1.msra.mxu0 %v2234
  %2236 = vmatprep.subr.mxu0 0.0
  %v2237 = vand.u32 %v1599, 4294901760
  %v2238 = vsub.f32 %v1599, %v2237
  %v2239 = vand.u32 %v2238, 4294901760
  %2240 = vmatpush1.msra.mxu0 %v2239
  %2241 = vmatprep.subr.mxu0 0.0
  %v2242 = vand.u32 %v1598, 4294901760
  %v2243 = vsub.f32 %v1598, %v2242
  %v2244 = vand.u32 %v2243, 4294901760
  %2245 = vmatpush1.msra.mxu0 %v2244
  %2246 = vmatprep.subr.mxu0 0.0
  %2247 = vmatpush2.msra.mxu0 0.0
  %2248 = vmatprep.subr.mxu0 0.0
  %2249 = vmatpush2.msra.mxu0 0.0
  %2250 = vmatprep.subr.mxu0 0.0
  %2251 = vmatpush2.msra.mxu0 0.0
  %2252 = vmatprep.subr.mxu0 0.0
  %2253 = vmatpush2.msra.mxu0 0.0
  %2254 = vmatprep.subr.mxu0 0.0
  %2255 = vmatpush2.msra.mxu0 0.0
  %2256 = vmatprep.subr.mxu0 0.0
  %2257 = vmatpush2.msra.mxu0 0.0
  %2258 = vmatprep.subr.mxu0 0.0
  %2259 = vmatpush2.msra.mxu0 0.0
  %2260 = vmatprep.subr.mxu0 0.0
  %v2261 = vand.u32 %v1622, 4294901760
  %v2262 = vsub.f32 %v1622, %v2261
  %v2263 = vand.u32 %v2262, 4294901760
  %2264 = vmatpush2.msra.mxu0 %v2263
  %2265 = vmatprep.subr.mxu0 0.0
  %v2266 = vand.u32 %v1621, 4294901760
  %v2267 = vsub.f32 %v1621, %v2266
  %v2268 = vand.u32 %v2267, 4294901760
  %2269 = vmatpush2.msra.mxu0 %v2268
  %2270 = vmatprep.subr.mxu0 0.0
  %v2271 = vand.u32 %v1620, 4294901760
  %v2272 = vsub.f32 %v1620, %v2271
  %v2273 = vand.u32 %v2272, 4294901760
  %2274 = vmatpush2.msra.mxu0 %v2273
  %2275 = vmatprep.subr.mxu0 0.0
  %v2276 = vand.u32 %v1619, 4294901760
  %v2277 = vsub.f32 %v1619, %v2276
  %v2278 = vand.u32 %v2277, 4294901760
  %2279 = vmatpush2.msra.mxu0 %v2278
  %2280 = vmatprep.subr.mxu0 0.0
  %v2281 = vand.u32 %v1618, 4294901760
  %v2282 = vsub.f32 %v1618, %v2281
  %v2283 = vand.u32 %v2282, 4294901760
  %2284 = vmatpush2.msra.mxu0 %v2283
  %2285 = vmatprep.subr.mxu0 0.0
  %v2286 = vand.u32 %v1617, 4294901760
  %v2287 = vsub.f32 %v1617, %v2286
  %v2288 = vand.u32 %v2287, 4294901760
  %2289 = vmatpush2.msra.mxu0 %v2288
  %2290 = vmatprep.subr.mxu0 0.0
  %v2291 = vand.u32 %v1616, 4294901760
  %v2292 = vsub.f32 %v1616, %v2291
  %v2293 = vand.u32 %v2292, 4294901760
  %2294 = vmatpush2.msra.mxu0 %v2293
  %2295 = vmatprep.subr.mxu0 0.0
  %v2296 = vand.u32 %v1615, 4294901760
  %v2297 = vsub.f32 %v1615, %v2296
  %v2298 = vand.u32 %v2297, 4294901760
  %2299 = vmatpush2.msra.mxu0 %v2298
  %2300 = vmatprep.subr.mxu0 0.0
  %v2301 = vand.u32 %v1614, 4294901760
  %v2302 = vsub.f32 %v1614, %v2301
  %v2303 = vand.u32 %v2302, 4294901760
  %2304 = vmatpush2.msra.mxu0 %v2303
  %v2305 = vand.u32 %v1637, 4294901760
  %2306 = vmatprep.mubr.f32.mxu0 %v2305
  %v2307 = vand.u32 %v1630, 4294901760
  %2308 = vmatmul.mubr.f32.gmra.mxu0 %v2307
  %v2309 = vpop.f32.mrf.mxu0
  %v2310 = vadd.f32 %v2163, %v2309
  %v2311 = vpop.f32.mrf.mxu0
  %2312 = vdwg.mxu0
  %2313 = vmatprep.subr.mxu0 0.0
  %v2314 = vand.u32 %v1613, 4294901760
  %2315 = vmatpush1.msra.mxu0 %v2314
  %2316 = vmatprep.subr.mxu0 0.0
  %v2317 = vand.u32 %v1612, 4294901760
  %2318 = vmatpush1.msra.mxu0 %v2317
  %2319 = vmatprep.subr.mxu0 0.0
  %v2320 = vand.u32 %v1611, 4294901760
  %2321 = vmatpush1.msra.mxu0 %v2320
  %2322 = vmatprep.subr.mxu0 0.0
  %v2323 = vand.u32 %v1610, 4294901760
  %2324 = vmatpush1.msra.mxu0 %v2323
  %2325 = vmatprep.subr.mxu0 0.0
  %v2326 = vand.u32 %v1609, 4294901760
  %2327 = vmatpush1.msra.mxu0 %v2326
  %2328 = vmatprep.subr.mxu0 0.0
  %v2329 = vand.u32 %v1608, 4294901760
  %2330 = vmatpush1.msra.mxu0 %v2329
  %2331 = vmatprep.subr.mxu0 0.0
  %v2332 = vand.u32 %v1607, 4294901760
  %2333 = vmatpush1.msra.mxu0 %v2332
  %2334 = vmatprep.subr.mxu0 0.0
  %v2335 = vand.u32 %v1606, 4294901760
  %2336 = vmatpush1.msra.mxu0 %v2335
  %2337 = vmatprep.subr.mxu0 0.0
  %v2338 = vand.u32 %v1605, 4294901760
  %2339 = vmatpush1.msra.mxu0 %v2338
  %2340 = vmatprep.subr.mxu0 0.0
  %v2341 = vand.u32 %v1604, 4294901760
  %2342 = vmatpush1.msra.mxu0 %v2341
  %2343 = vmatprep.subr.mxu0 0.0
  %v2344 = vand.u32 %v1603, 4294901760
  %2345 = vmatpush1.msra.mxu0 %v2344
  %2346 = vmatprep.subr.mxu0 0.0
  %v2347 = vand.u32 %v1602, 4294901760
  %2348 = vmatpush1.msra.mxu0 %v2347
  %2349 = vmatprep.subr.mxu0 0.0
  %v2350 = vand.u32 %v1601, 4294901760
  %2351 = vmatpush1.msra.mxu0 %v2350
  %2352 = vmatprep.subr.mxu0 0.0
  %v2353 = vand.u32 %v1600, 4294901760
  %2354 = vmatpush1.msra.mxu0 %v2353
  %2355 = vmatprep.subr.mxu0 0.0
  %v2356 = vand.u32 %v1599, 4294901760
  %2357 = vmatpush1.msra.mxu0 %v2356
  %2358 = vmatprep.subr.mxu0 0.0
  %v2359 = vand.u32 %v1598, 4294901760
  %2360 = vmatpush1.msra.mxu0 %v2359
  %2361 = vmatprep.subr.mxu0 0.0
  %2362 = vmatpush2.msra.mxu0 0.0
  %2363 = vmatprep.subr.mxu0 0.0
  %2364 = vmatpush2.msra.mxu0 0.0
  %2365 = vmatprep.subr.mxu0 0.0
  %2366 = vmatpush2.msra.mxu0 0.0
  %2367 = vmatprep.subr.mxu0 0.0
  %2368 = vmatpush2.msra.mxu0 0.0
  %2369 = vmatprep.subr.mxu0 0.0
  %2370 = vmatpush2.msra.mxu0 0.0
  %2371 = vmatprep.subr.mxu0 0.0
  %2372 = vmatpush2.msra.mxu0 0.0
  %2373 = vmatprep.subr.mxu0 0.0
  %2374 = vmatpush2.msra.mxu0 0.0
  %2375 = vmatprep.subr.mxu0 0.0
  %v2376 = vand.u32 %v1622, 4294901760
  %2377 = vmatpush2.msra.mxu0 %v2376
  %2378 = vmatprep.subr.mxu0 0.0
  %v2379 = vand.u32 %v1621, 4294901760
  %2380 = vmatpush2.msra.mxu0 %v2379
  %2381 = vmatprep.subr.mxu0 0.0
  %v2382 = vand.u32 %v1620, 4294901760
  %2383 = vmatpush2.msra.mxu0 %v2382
  %2384 = vmatprep.subr.mxu0 0.0
  %v2385 = vand.u32 %v1619, 4294901760
  %2386 = vmatpush2.msra.mxu0 %v2385
  %2387 = vmatprep.subr.mxu0 0.0
  %v2388 = vand.u32 %v1618, 4294901760
  %2389 = vmatpush2.msra.mxu0 %v2388
  %2390 = vmatprep.subr.mxu0 0.0
  %v2391 = vand.u32 %v1617, 4294901760
  %2392 = vmatpush2.msra.mxu0 %v2391
  %2393 = vmatprep.subr.mxu0 0.0
  %v2394 = vand.u32 %v1616, 4294901760
  %2395 = vmatpush2.msra.mxu0 %v2394
  %2396 = vmatprep.subr.mxu0 0.0
  %v2397 = vand.u32 %v1615, 4294901760
  %2398 = vmatpush2.msra.mxu0 %v2397
  %2399 = vmatprep.subr.mxu0 0.0
  %v2400 = vand.u32 %v1614, 4294901760
  %2401 = vmatpush2.msra.mxu0 %v2400
  %v2402 = vand.u32 %v1637, 4294901760
  %2403 = vmatprep.mubr.f32.mxu0 %v2402
  %v2404 = vand.u32 %v1630, 4294901760
  %2405 = vmatmul.mubr.f32.gmra.mxu0 %v2404
  %v2406 = vpop.f32.mrf.mxu0
  %v2407 = vadd.f32 %v2310, %v2406
  %v2408 = vpop.f32.mrf.mxu0
  %2409 = vdwg.mxu0
  %2410 = vst [vmem:[%s4] sm:$0x1] %v2407
  // Predicated region
  $region18: #{stock_predictor_forward.1} parent=0 // pred_check
    _
  $region19: #{stock_predictor_forward.1} parent=0 // pred_check_branch
    %2412 = sbr.rel (0) target = $region21
  $region20: #{stock_predictor_forward.1} parent=0 // pred_region
    _
  $region21: #{stock_predictor_forward.1} parent=0 // pred_fallthru
    _
  // Predicated region
  $region22: #{stock_predictor_forward.1} parent=0 // pred_check
    _
  $region23: #{stock_predictor_forward.1} parent=0 // pred_check_branch
    %2414 = sbr.rel (0) target = $region25
  $region24: #{stock_predictor_forward.1} parent=0 // pred_region
    _
  $region25: #{stock_predictor_forward.1} parent=0 // pred_fallthru
    _

</llo_original>
